<compile_context>
chip_gen: v7x
topology: tpu7x:2x2x1
jax: 0.10.0
libtpu: 0.0.40
codegen_flags: <defaults>
</compile_context>

<pallas_src>
import numpy as np
import jax
import jax.numpy as jnp
from jax import lax
from jax.experimental import pallas as pl
from jax.experimental.pallas import tpu as pltpu

START_TAG = "<s>"
END_TAG = "<e>"
NEG = -10000.0
PATH_LANES = 128   # lane-dense int32/f32 outputs (unmasked vst)


# ----------------------------------------------------------------------------
# Fused kernel
# ----------------------------------------------------------------------------
def make_bilstm_crf_kernel(T, E, H2, KP, start_ix, end_ix):
    G = 8 * H2            # 128 packed gate lanes: blocks [i|f|g|o], each [fwd H2 | bwd H2]
    HC = 2 * H2           # 32 packed hidden/cell lanes: [h_f | h_b]

    def kernel(sent_ref, emb_ref, w2_ref, b2_ref, whh2_ref, h0_ref, c0_ref,
               wtag_ref, btag_ref, transT_ref,
               feats_ref, path_ref, score_ref, start_ref,
               x2_ref, hcat_ref, bptrs_ref):
        # ---- Phase 0: embedding gather (sentence lives in SMEM) --------------
        # x2[s, 0:E]  = emb[sent[s]]        (forward-direction input at step s)
        # x2[s, E:2E] = emb[sent[T-1-s]]    (time-reversed input for backward dir)
        for t in range(T):
            idx = sent_ref[t]
            row = emb_ref[pl.ds(idx, 1), :]                       # (1, E)
            x2_ref[t:t + 1, 0:E] = row
            x2_ref[T - 1 - t:T - t, E:2 * E] = row

        # ---- Phase 1: fused input projection for BOTH directions -------------
        xw = jnp.dot(x2_ref[...], w2_ref[...],
                     preferred_element_type=jnp.float32) + b2_ref[...]   # (T, 128)
        whh2 = whh2_ref[...]                                             # (HC, 128)

        # per-lane activation constants: sigmoid for i/f/o lanes, tanh for g lanes
        lane = lax.broadcasted_iota(jnp.int32, (1, G), 1)
        is_g = (lane >= 2 * HC) & (lane < 3 * HC)
        a_scale = jnp.where(is_g, 1.0, 0.5).astype(jnp.float32)
        a_add = jnp.where(is_g, 0.0, 0.5).astype(jnp.float32)

        # ---- Phase 2: merged fwd+bwd recurrence, fully unrolled (T static) ----
        h = h0_ref[...]                                                  # (1, HC)
        c = c0_ref[...]
        for s in range(T):
            gates = xw[s:s + 1, :] + jnp.dot(
                h, whh2, preferred_element_type=jnp.float32)             # (1, 128)
            act = jnp.tanh(gates * a_scale) * a_scale + a_add            # one EUP pass
            i = act[:, 0 * HC:1 * HC]
            f = act[:, 1 * HC:2 * HC]
            g = act[:, 2 * HC:3 * HC]
            o = act[:, 3 * HC:4 * HC]
            c = f * c + i * g
            h = o * jnp.tanh(c)
            # forward half belongs to time s, backward half to time T-1-s
            hcat_ref[s:s + 1, 0:H2] = h[:, 0:H2]
            hcat_ref[T - 1 - s:T - s, H2:2 * H2] = h[:, H2:2 * H2]

        # ---- Phase 3: hidden2tag (tag dim padded to KP, pad cols = 0) ---------
        feats = jnp.dot(hcat_ref[...], wtag_ref[...],
                        preferred_element_type=jnp.float32) + btag_ref[...]  # (T, KP)
        feats_ref[...] = feats

        # ---- Phase 4: Viterbi DP ---------------------------------------------
        # transT[prev, next] (pads = -1e4); forward_var carried as (KP,1) column
        # so max/argmax are single sublane reductions producing (1,KP) rows.
        transT = transT_ref[...]
        sub_iota = lax.broadcasted_iota(jnp.int32, (KP, KP), 0)
        lane_iota = lax.broadcasted_iota(jnp.int32, (KP, KP), 1)
        eye_f = (sub_iota == lane_iota).astype(jnp.float32)
        col_iota = lax.broadcasted_iota(jnp.int32, (KP, 1), 0)
        row_iota = lax.broadcasted_iota(jnp.int32, (1, KP), 1)

        fv = jnp.where(col_iota == start_ix, 0.0, NEG).astype(jnp.float32)  # (KP,1)
        for t in range(T):
            ntv = fv + transT                                    # (KP, KP) [prev, next]
            m_row = jnp.max(ntv, axis=0, keepdims=True)          # (1, KP)
            bp_row = jnp.min(jnp.where(ntv == m_row, sub_iota, KP),
                             axis=0, keepdims=True)              # first argmax over prev
            bptrs_ref[t:t + 1, :] = bp_row
            fv_row = m_row + feats[t:t + 1, :]                   # (1, KP)
            fv = jnp.sum(fv_row * eye_f, axis=1, keepdims=True)  # row -> column

        term = fv + transT[:, end_ix:end_ix + 1]                 # (KP, 1)
        score_11 = jnp.max(term, axis=0, keepdims=True)          # (1, 1)
        best = jnp.min(jnp.where(term == score_11, col_iota, KP),
                       axis=0, keepdims=True)                    # (1, 1) int32
        score_ref[...] = jnp.broadcast_to(score_11, (1, PATH_LANES))

        # ---- Phase 5: in-kernel traceback (vectorized one-hot selects) --------
        for t in range(T - 1, -1, -1):
            path_ref[t:t + 1, :] = jnp.broadcast_to(best, (1, PATH_LANES))
            onehot = (row_iota == best).astype(jnp.int32)        # (1, KP)
            best = jnp.sum(bptrs_ref[t:t + 1, :] * onehot,
                           axis=1, keepdims=True)                # (1, 1)
        start_ref[...] = jnp.broadcast_to(best, (1, PATH_LANES))  # must equal START

    return kernel


# ----------------------------------------------------------------------------
# Wrapper
# ----------------------------------------------------------------------------
def bilstm_crf_forward(sentence, packed, tag2ix, T, E, H2, K, KP=8):
    kernel = make_bilstm_crf_kernel(T, E, H2, KP,
                                    tag2ix[START_TAG], tag2ix[END_TAG])
    vmem = pl.BlockSpec(memory_space=pltpu.MemorySpace.VMEM)
    smem = pl.BlockSpec(memory_space=pltpu.MemorySpace.SMEM)
    feats, path, score, start = pl.pallas_call(
        kernel,
        out_shape=(jax.ShapeDtypeStruct((T, KP), jnp.float32),          # feats (padded)
                   jax.ShapeDtypeStruct((T, PATH_LANES), jnp.int32),    # decoded path
                   jax.ShapeDtypeStruct((1, PATH_LANES), jnp.float32),  # path score
                   jax.ShapeDtypeStruct((1, PATH_LANES), jnp.int32)),   # start-tag check
        in_specs=[smem] + [vmem] * 9,
        out_specs=(vmem, vmem, vmem, vmem),
        scratch_shapes=[
            pltpu.VMEM((T, 2 * E), jnp.float32),      # x2 = [x | x time-reversed]
            pltpu.VMEM((T, 2 * H2), jnp.float32),     # hcat = [h_fwd | h_bwd] per time
            pltpu.VMEM((T, KP), jnp.int32),           # Viterbi backpointers
        ],
        compiler_params=pltpu.CompilerParams(vmem_limit_bytes=4 * 1024 * 1024),
        cost_estimate=pl.CostEstimate(flops=220_000, transcendentals=1_300,
                                      bytes_accessed=70_000),
    )(sentence.astype(jnp.int32), packed["emb"], packed["w2"], packed["b2"],
      packed["whh2"], packed["h0"], packed["c0"], packed["wtag"],
      packed["btag"], packed["transT"])

    jax.block_until_ready((feats, path, score, start))
    start_tag = int(np.asarray(jax.device_get(start))[0, 0])
    assert start_tag == tag2ix[START_TAG]
    best_path = [int(v) for v in np.asarray(jax.device_get(path))[:, 0]]
    path_score = float(np.asarray(jax.device_get(score))[0, 0])
    feats_np = np.asarray(jax.device_get(feats))[:, :K]
    return path_score, best_path, feats_np


# ----------------------------------------------------------------------------
# Host-side parameter packing (pure layout work, no math changes)
# ----------------------------------------------------------------------------
def pack_params(P, K, KP=8):
    g = lambda a: np.asarray(jax.device_get(a), dtype=np.float32)
    emb = g(P["emb"]); w_tag = g(P["w_tag"]); b_tag = g(P["b_tag"])
    wih_f, whh_f = g(P["wih_f"]), g(P["whh_f"])
    wih_b, whh_b = g(P["wih_b"]), g(P["whh_b"])
    bf = g(P["bih_f"]) + g(P["bhh_f"])
    bb = g(P["bih_b"]) + g(P["bhh_b"])
    trans = g(P["transitions"]); h0 = g(P["h0"]); c0 = g(P["c0"])

    V, E = emb.shape
    H2 = whh_f.shape[1]
    G, HC = 8 * H2, 2 * H2

    Vp = ((V + 7) // 8) * 8
    emb_pad = np.zeros((Vp, E), np.float32); emb_pad[:V] = emb

    W2 = np.zeros((2 * E, G), np.float32)     # [x | x_rev] -> packed gates
    Whh2 = np.zeros((HC, G), np.float32)      # [h_f | h_b] -> packed gates
    b2 = np.zeros((1, G), np.float32)
    for gb in range(4):                       # PyTorch gate order: i, f, g, o
        fcol = slice(gb * HC, gb * HC + H2)
        bcol = slice(gb * HC + H2, (gb + 1) * HC)
        grow = slice(gb * H2, (gb + 1) * H2)
        W2[0:E, fcol] = wih_f[grow, :].T
        W2[E:2 * E, bcol] = wih_b[grow, :].T
        Whh2[0:H2, fcol] = whh_f[grow, :].T
        Whh2[H2:HC, bcol] = whh_b[grow, :].T
        b2[0, fcol] = bf[grow]
        b2[0, bcol] = bb[grow]

    Wt2 = np.zeros((HC, KP), np.float32); Wt2[:, :K] = w_tag.T
    btag = np.zeros((1, KP), np.float32); btag[0, :K] = b_tag

    transT = np.full((KP, KP), NEG, np.float32)
    transT[:K, :K] = trans.T                  # transT[prev, next] = transitions[next, prev]

    h0p = np.concatenate([h0[0, 0], h0[1, 0]])[None, :]
    c0p = np.concatenate([c0[0, 0], c0[1, 0]])[None, :]

    to = jnp.asarray
    return dict(emb=to(emb_pad), w2=to(W2), b2=to(b2), whh2=to(Whh2),
                h0=to(h0p), c0=to(c0p), wtag=to(Wt2), btag=to(btag),
                transT=to(transT))


# ----------------------------------------------------------------------------
# NumPy reference (same math as the PyTorch module) for a sanity check
# ----------------------------------------------------------------------------
def numpy_reference(sentence, P, tag2ix, T, H2, K):
    g = lambda a: np.asarray(jax.device_get(a), dtype=np.float32)
    x = g(P["emb"])[np.asarray(jax.device_get(sentence))]

    def sig(v):
        return 1.0 / (1.0 + np.exp(-v))

    def run_dir(wih, whh, b, h, c, reverse):
        hs = np.zeros((T, H2), np.float32)
        order = range(T - 1, -1, -1) if reverse else range(T)
        for t in order:
            gates = x[t] @ wih.T + h @ whh.T + b
            i = sig(gates[0:H2]); f = sig(gates[H2:2 * H2])
            gg = np.tanh(gates[2 * H2:3 * H2]); o = sig(gates[3 * H2:4 * H2])
            c = f * c + i * gg
            h = o * np.tanh(c)
            hs[t] = h
        return hs

    hf = run_dir(g(P["wih_f"]), g(P["whh_f"]), g(P["bih_f"]) + g(P["bhh_f"]),
                 g(P["h0"])[0, 0], g(P["c0"])[0, 0], False)
    hb = run_dir(g(P["wih_b"]), g(P["whh_b"]), g(P["bih_b"]) + g(P["bhh_b"]),
                 g(P["h0"])[1, 0], g(P["c0"])[1, 0], True)
    feats = np.concatenate([hf, hb], axis=1) @ g(P["w_tag"]).T + g(P["b_tag"])

    trans = g(P["transitions"])
    fv = np.full((K,), -10000.0, np.float32)
    fv[tag2ix[START_TAG]] = 0.0
    backpointers = []
    for t in range(T):
        bp, vv = [], []
        for nxt in range(K):
            ntv = fv + trans[nxt]
            b = int(np.argmax(ntv))
            bp.append(b)
            vv.append(ntv[b])
        fv = np.asarray(vv, np.float32) + feats[t]
        backpointers.append(bp)
    terminal = fv + trans[tag2ix[END_TAG]]
    best = int(np.argmax(terminal))
    score = float(terminal[best])
    path = [best]
    for bp in reversed(backpointers):
        best = bp[best]
        path.append(best)
    s = path.pop()
    assert s == tag2ix[START_TAG]
    path.reverse()
    return score, path, feats


# ----------------------------------------------------------------------------
if __name__ == "__main__":
    tag2ix = {"B": 0, "I": 1, "O": 2, START_TAG: 3, END_TAG: 4}
    vocab_size = 20
    embedding_dim = 32
    hidden_dim = 32
    H2 = hidden_dim // 2
    K = len(tag2ix)
    KP = 8
    T = 8

    key = jax.random.PRNGKey(0)
    ks = jax.random.split(key, 16)
    sc_h = 1.0 / np.sqrt(H2)
    sc_l = 1.0 / np.sqrt(hidden_dim)
    u = lambda k, shape, s: jax.random.uniform(k, shape, jnp.float32, -s, s)

    emb = jax.random.normal(ks[0], (vocab_size, embedding_dim), jnp.float32)
    wih_f = u(ks[1], (4 * H2, embedding_dim), sc_h)
    whh_f = u(ks[2], (4 * H2, H2), sc_h)
    bih_f = u(ks[3], (4 * H2,), sc_h)
    bhh_f = u(ks[4], (4 * H2,), sc_h)
    wih_b = u(ks[5], (4 * H2, embedding_dim), sc_h)
    whh_b = u(ks[6], (4 * H2, H2), sc_h)
    bih_b = u(ks[7], (4 * H2,), sc_h)
    bhh_b = u(ks[8], (4 * H2,), sc_h)
    w_tag = u(ks[9], (K, hidden_dim), sc_l)
    b_tag = u(ks[10], (K,), sc_l)
    transitions = jax.random.normal(ks[11], (K, K), jnp.float32)
    transitions = transitions.at[tag2ix[START_TAG], :].set(-10000.0)
    transitions = transitions.at[:, tag2ix[END_TAG]].set(-10000.0)
    # deterministic stand-in for torch.randn init_hidden()
    h0 = jax.random.normal(ks[12], (2, 1, H2), jnp.float32)
    c0 = jax.random.normal(ks[13], (2, 1, H2), jnp.float32)
    sentence = jax.random.randint(ks[14], (T,), 0, vocab_size)

    raw = dict(emb=emb, wih_f=wih_f, whh_f=whh_f, bih_f=bih_f, bhh_f=bhh_f,
               wih_b=wih_b, whh_b=whh_b, bih_b=bih_b, bhh_b=bhh_b,
               w_tag=w_tag, b_tag=b_tag, transitions=transitions, h0=h0, c0=c0)
    packed = pack_params(raw, K, KP)

    score, tag_seq, feats_k = bilstm_crf_forward(
        sentence, packed, tag2ix, T, embedding_dim, H2, K, KP)

    # sanity check against a pure-NumPy reference of the PyTorch math
    ref_score, ref_path, ref_feats = numpy_reference(sentence, raw, tag2ix, T, H2, K)

    assert feats_k.shape == (T, K)
    assert np.all(np.isfinite(feats_k))
    assert np.allclose(feats_k, ref_feats, rtol=3e-2, atol=3e-2), (
        "feats mismatch:\n%r\n%r" % (feats_k, ref_feats))
    assert tag_seq == ref_path, (tag_seq, ref_path)
    assert abs(score - ref_score) < 0.2, (score, ref_score)

    print("KERNEL_OK")
</pallas_src>

<mosaic_0001>
module attributes {stable_mosaic.version = 11 : i64} {
  func.func @kernel(%arg0: memref<8xi32, #tpu.memory_space<smem>>, %arg1: memref<24x32xf32, #tpu.memory_space<vmem>>, %arg2: memref<64x128xf32, #tpu.memory_space<vmem>>, %arg3: memref<1x128xf32, #tpu.memory_space<vmem>>, %arg4: memref<32x128xf32, #tpu.memory_space<vmem>>, %arg5: memref<1x32xf32, #tpu.memory_space<vmem>>, %arg6: memref<1x32xf32, #tpu.memory_space<vmem>>, %arg7: memref<32x8xf32, #tpu.memory_space<vmem>>, %arg8: memref<1x8xf32, #tpu.memory_space<vmem>>, %arg9: memref<8x8xf32, #tpu.memory_space<vmem>>, %arg10: memref<8x8xf32, #tpu.memory_space<vmem>>, %arg11: memref<8x128xi32, #tpu.memory_space<vmem>>, %arg12: memref<1x128xf32, #tpu.memory_space<vmem>>, %arg13: memref<1x128xi32, #tpu.memory_space<vmem>>, %arg14: memref<8x64xf32, #tpu.memory_space<vmem>>, %arg15: memref<8x32xf32, #tpu.memory_space<vmem>>, %arg16: memref<8x8xi32, #tpu.memory_space<vmem>>) attributes {dimension_semantics = [], scalar_prefetch = 0 : i64, scratch_operands = 3 : i64, tpu.core_type = #tpu.core_type<tc>} {
    %c0 = arith.constant 0 : index
    %0 = memref.load %arg0[%c0] : memref<8xi32, #tpu.memory_space<smem>>
    %1 = arith.index_cast %0 : i32 to index
    %c0_0 = arith.constant 0 : index
    %2 = vector.load %arg1[%1, %c0_0] : memref<24x32xf32, #tpu.memory_space<vmem>>, vector<1x32xf32>
    %c0_1 = arith.constant 0 : index
    %c0_2 = arith.constant 0 : index
    %3 = vector.load %arg14[%c0_1, %c0_2] : memref<8x64xf32, #tpu.memory_space<vmem>>, vector<1x32xf32>
    tpu.vector_store %arg14[%c0_1, %c0_2], %2 {strides = array<i32>} : memref<8x64xf32, #tpu.memory_space<vmem>>, vector<1x32xf32>,
    %c7 = arith.constant 7 : index
    %c32 = arith.constant 32 : index
    %4 = vector.load %arg14[%c7, %c32] : memref<8x64xf32, #tpu.memory_space<vmem>>, vector<1x32xf32>
    tpu.vector_store %arg14[%c7, %c32], %2 {strides = array<i32>} : memref<8x64xf32, #tpu.memory_space<vmem>>, vector<1x32xf32>,
    %c1 = arith.constant 1 : index
    %5 = memref.load %arg0[%c1] : memref<8xi32, #tpu.memory_space<smem>>
    %6 = arith.index_cast %5 : i32 to index
    %c0_3 = arith.constant 0 : index
    %7 = vector.load %arg1[%6, %c0_3] : memref<24x32xf32, #tpu.memory_space<vmem>>, vector<1x32xf32>
    %c1_4 = arith.constant 1 : index
    %c0_5 = arith.constant 0 : index
    %8 = vector.load %arg14[%c1_4, %c0_5] : memref<8x64xf32, #tpu.memory_space<vmem>>, vector<1x32xf32>
    tpu.vector_store %arg14[%c1_4, %c0_5], %7 {strides = array<i32>} : memref<8x64xf32, #tpu.memory_space<vmem>>, vector<1x32xf32>,
    %c6 = arith.constant 6 : index
    %c32_6 = arith.constant 32 : index
    %9 = vector.load %arg14[%c6, %c32_6] : memref<8x64xf32, #tpu.memory_space<vmem>>, vector<1x32xf32>
    tpu.vector_store %arg14[%c6, %c32_6], %7 {strides = array<i32>} : memref<8x64xf32, #tpu.memory_space<vmem>>, vector<1x32xf32>,
    %c2 = arith.constant 2 : index
    %10 = memref.load %arg0[%c2] : memref<8xi32, #tpu.memory_space<smem>>
    %11 = arith.index_cast %10 : i32 to index
    %c0_7 = arith.constant 0 : index
    %12 = vector.load %arg1[%11, %c0_7] : memref<24x32xf32, #tpu.memory_space<vmem>>, vector<1x32xf32>
    %c2_8 = arith.constant 2 : index
    %c0_9 = arith.constant 0 : index
    %13 = vector.load %arg14[%c2_8, %c0_9] : memref<8x64xf32, #tpu.memory_space<vmem>>, vector<1x32xf32>
    tpu.vector_store %arg14[%c2_8, %c0_9], %12 {strides = array<i32>} : memref<8x64xf32, #tpu.memory_space<vmem>>, vector<1x32xf32>,
    %c5 = arith.constant 5 : index
    %c32_10 = arith.constant 32 : index
    %14 = vector.load %arg14[%c5, %c32_10] : memref<8x64xf32, #tpu.memory_space<vmem>>, vector<1x32xf32>
    tpu.vector_store %arg14[%c5, %c32_10], %12 {strides = array<i32>} : memref<8x64xf32, #tpu.memory_space<vmem>>, vector<1x32xf32>,
    %c3 = arith.constant 3 : index
    %15 = memref.load %arg0[%c3] : memref<8xi32, #tpu.memory_space<smem>>
    %16 = arith.index_cast %15 : i32 to index
    %c0_11 = arith.constant 0 : index
    %17 = vector.load %arg1[%16, %c0_11] : memref<24x32xf32, #tpu.memory_space<vmem>>, vector<1x32xf32>
    %c3_12 = arith.constant 3 : index
    %c0_13 = arith.constant 0 : index
    %18 = vector.load %arg14[%c3_12, %c0_13] : memref<8x64xf32, #tpu.memory_space<vmem>>, vector<1x32xf32>
    tpu.vector_store %arg14[%c3_12, %c0_13], %17 {strides = array<i32>} : memref<8x64xf32, #tpu.memory_space<vmem>>, vector<1x32xf32>,
    %c4 = arith.constant 4 : index
    %c32_14 = arith.constant 32 : index
    %19 = vector.load %arg14[%c4, %c32_14] : memref<8x64xf32, #tpu.memory_space<vmem>>, vector<1x32xf32>
    tpu.vector_store %arg14[%c4, %c32_14], %17 {strides = array<i32>} : memref<8x64xf32, #tpu.memory_space<vmem>>, vector<1x32xf32>,
    %c4_15 = arith.constant 4 : index
    %20 = memref.load %arg0[%c4_15] : memref<8xi32, #tpu.memory_space<smem>>
    %21 = arith.index_cast %20 : i32 to index
    %c0_16 = arith.constant 0 : index
    %22 = vector.load %arg1[%21, %c0_16] : memref<24x32xf32, #tpu.memory_space<vmem>>, vector<1x32xf32>
    %c4_17 = arith.constant 4 : index
    %c0_18 = arith.constant 0 : index
    %23 = vector.load %arg14[%c4_17, %c0_18] : memref<8x64xf32, #tpu.memory_space<vmem>>, vector<1x32xf32>
    tpu.vector_store %arg14[%c4_17, %c0_18], %22 {strides = array<i32>} : memref<8x64xf32, #tpu.memory_space<vmem>>, vector<1x32xf32>,
    %c3_19 = arith.constant 3 : index
    %c32_20 = arith.constant 32 : index
    %24 = vector.load %arg14[%c3_19, %c32_20] : memref<8x64xf32, #tpu.memory_space<vmem>>, vector<1x32xf32>
    tpu.vector_store %arg14[%c3_19, %c32_20], %22 {strides = array<i32>} : memref<8x64xf32, #tpu.memory_space<vmem>>, vector<1x32xf32>,
    %c5_21 = arith.constant 5 : index
    %25 = memref.load %arg0[%c5_21] : memref<8xi32, #tpu.memory_space<smem>>
    %26 = arith.index_cast %25 : i32 to index
    %c0_22 = arith.constant 0 : index
    %27 = vector.load %arg1[%26, %c0_22] : memref<24x32xf32, #tpu.memory_space<vmem>>, vector<1x32xf32>
    %c5_23 = arith.constant 5 : index
    %c0_24 = arith.constant 0 : index
    %28 = vector.load %arg14[%c5_23, %c0_24] : memref<8x64xf32, #tpu.memory_space<vmem>>, vector<1x32xf32>
    tpu.vector_store %arg14[%c5_23, %c0_24], %27 {strides = array<i32>} : memref<8x64xf32, #tpu.memory_space<vmem>>, vector<1x32xf32>,
    %c2_25 = arith.constant 2 : index
    %c32_26 = arith.constant 32 : index
    %29 = vector.load %arg14[%c2_25, %c32_26] : memref<8x64xf32, #tpu.memory_space<vmem>>, vector<1x32xf32>
    tpu.vector_store %arg14[%c2_25, %c32_26], %27 {strides = array<i32>} : memref<8x64xf32, #tpu.memory_space<vmem>>, vector<1x32xf32>,
    %c6_27 = arith.constant 6 : index
    %30 = memref.load %arg0[%c6_27] : memref<8xi32, #tpu.memory_space<smem>>
    %31 = arith.index_cast %30 : i32 to index
    %c0_28 = arith.constant 0 : index
    %32 = vector.load %arg1[%31, %c0_28] : memref<24x32xf32, #tpu.memory_space<vmem>>, vector<1x32xf32>
    %c6_29 = arith.constant 6 : index
    %c0_30 = arith.constant 0 : index
    %33 = vector.load %arg14[%c6_29, %c0_30] : memref<8x64xf32, #tpu.memory_space<vmem>>, vector<1x32xf32>
    tpu.vector_store %arg14[%c6_29, %c0_30], %32 {strides = array<i32>} : memref<8x64xf32, #tpu.memory_space<vmem>>, vector<1x32xf32>,
    %c1_31 = arith.constant 1 : index
    %c32_32 = arith.constant 32 : index
    %34 = vector.load %arg14[%c1_31, %c32_32] : memref<8x64xf32, #tpu.memory_space<vmem>>, vector<1x32xf32>
    tpu.vector_store %arg14[%c1_31, %c32_32], %32 {strides = array<i32>} : memref<8x64xf32, #tpu.memory_space<vmem>>, vector<1x32xf32>,
    %c7_33 = arith.constant 7 : index
    %35 = memref.load %arg0[%c7_33] : memref<8xi32, #tpu.memory_space<smem>>
    %36 = arith.index_cast %35 : i32 to index
    %c0_34 = arith.constant 0 : index
    %37 = vector.load %arg1[%36, %c0_34] : memref<24x32xf32, #tpu.memory_space<vmem>>, vector<1x32xf32>
    %c7_35 = arith.constant 7 : index
    %c0_36 = arith.constant 0 : index
    %38 = vector.load %arg14[%c7_35, %c0_36] : memref<8x64xf32, #tpu.memory_space<vmem>>, vector<1x32xf32>
    tpu.vector_store %arg14[%c7_35, %c0_36], %37 {strides = array<i32>} : memref<8x64xf32, #tpu.memory_space<vmem>>, vector<1x32xf32>,
    %c0_37 = arith.constant 0 : index
    %c32_38 = arith.constant 32 : index
    %39 = vector.load %arg14[%c0_37, %c32_38] : memref<8x64xf32, #tpu.memory_space<vmem>>, vector<1x32xf32>
    tpu.vector_store %arg14[%c0_37, %c32_38], %37 {strides = array<i32>} : memref<8x64xf32, #tpu.memory_space<vmem>>, vector<1x32xf32>,
    %c0_39 = arith.constant 0 : index
    %c0_40 = arith.constant 0 : index
    %40 = vector.load %arg14[%c0_39, %c0_40] : memref<8x64xf32, #tpu.memory_space<vmem>>, vector<8x64xf32>
    %c0_41 = arith.constant 0 : index
    %c0_42 = arith.constant 0 : index
    %41 = vector.load %arg2[%c0_41, %c0_42] : memref<64x128xf32, #tpu.memory_space<vmem>>, vector<64x128xf32>
    %cst = arith.constant dense<0.000000e+00> : vector<8x128xf32>
    %42 = tpu.matmul %40, %41, %cst {dimension_numbers = #tpu.dot_dimension_numbers<[1], [0], [0], [1], [0, 0, 1, 1], [], []>} : vector<8x64xf32>, vector<64x128xf32>, vector<8x128xf32> -> vector<8x128xf32>
    %c0_43 = arith.constant 0 : index
    %c0_44 = arith.constant 0 : index
    %43 = vector.load %arg3[%c0_43, %c0_44] : memref<1x128xf32, #tpu.memory_space<vmem>>, vector<1x128xf32>
    %44 = vector.broadcast %43 : vector<1x128xf32> to vector<8x128xf32>
    %45 = arith.addf %42, %44 : vector<8x128xf32>
    %c0_45 = arith.constant 0 : index
    %c0_46 = arith.constant 0 : index
    %46 = vector.load %arg4[%c0_45, %c0_46] : memref<32x128xf32, #tpu.memory_space<vmem>>, vector<32x128xf32>
    %47 = tpu.iota {dimensions = array<i32: 1>} : vector<1x128xi32>
    %c64_i32 = arith.constant 64 : i32
    %48 = vector.broadcast %c64_i32 : i32 to vector<1x128xi32>
    %49 = arith.cmpi sge, %47, %48 : vector<1x128xi32>
    %c96_i32 = arith.constant 96 : i32
    %50 = vector.broadcast %c96_i32 : i32 to vector<1x128xi32>
    %51 = arith.cmpi slt, %47, %50 : vector<1x128xi32>
    %52 = arith.andi %49, %51 : vector<1x128xi1>
    %cst_47 = arith.constant 1.000000e+00 : f32
    %cst_48 = arith.constant 5.000000e-01 : f32
    %53 = vector.broadcast %cst_47 : f32 to vector<1x128xf32>
    %54 = vector.broadcast %cst_48 : f32 to vector<1x128xf32>
    %55 = arith.select %52, %53, %54 : vector<1x128xi1>, vector<1x128xf32>
    %cst_49 = arith.constant 0.000000e+00 : f32
    %cst_50 = arith.constant 5.000000e-01 : f32
    %56 = vector.broadcast %cst_49 : f32 to vector<1x128xf32>
    %57 = vector.broadcast %cst_50 : f32 to vector<1x128xf32>
    %58 = arith.select %52, %56, %57 : vector<1x128xi1>, vector<1x128xf32>
    %c0_51 = arith.constant 0 : index
    %c0_52 = arith.constant 0 : index
    %59 = vector.load %arg5[%c0_51, %c0_52] : memref<1x32xf32, #tpu.memory_space<vmem>>, vector<1x32xf32>
    %c0_53 = arith.constant 0 : index
    %c0_54 = arith.constant 0 : index
    %60 = vector.load %arg6[%c0_53, %c0_54] : memref<1x32xf32, #tpu.memory_space<vmem>>, vector<1x32xf32>
    %61 = vector.extract_strided_slice %45 {offsets = [0, 0], sizes = [1, 128], strides = [1, 1]} : vector<8x128xf32> to vector<1x128xf32>
    %cst_55 = arith.constant dense<0.000000e+00> : vector<1x128xf32>
    %62 = tpu.matmul %59, %46, %cst_55 {dimension_numbers = #tpu.dot_dimension_numbers<[1], [0], [0], [1], [0, 0, 1, 1], [], []>} : vector<1x32xf32>, vector<32x128xf32>, vector<1x128xf32> -> vector<1x128xf32>
    %63 = arith.addf %61, %62 : vector<1x128xf32>
    %64 = arith.mulf %63, %55 : vector<1x128xf32>
    %65 = math.tanh %64 : vector<1x128xf32>
    %66 = arith.mulf %65, %55 : vector<1x128xf32>
    %67 = arith.addf %66, %58 : vector<1x128xf32>
    %68 = vector.extract_strided_slice %67 {offsets = [0, 0], sizes = [1, 32], strides = [1, 1]} : vector<1x128xf32> to vector<1x32xf32>
    %69 = vector.extract_strided_slice %67 {offsets = [0, 32], sizes = [1, 32], strides = [1, 1]} : vector<1x128xf32> to vector<1x32xf32>
    %70 = vector.extract_strided_slice %67 {offsets = [0, 64], sizes = [1, 32], strides = [1, 1]} : vector<1x128xf32> to vector<1x32xf32>
    %71 = vector.extract_strided_slice %67 {offsets = [0, 96], sizes = [1, 32], strides = [1, 1]} : vector<1x128xf32> to vector<1x32xf32>
    %72 = arith.mulf %69, %60 : vector<1x32xf32>
    %73 = arith.mulf %68, %70 : vector<1x32xf32>
    %74 = arith.addf %72, %73 : vector<1x32xf32>
    %75 = math.tanh %74 : vector<1x32xf32>
    %76 = arith.mulf %71, %75 : vector<1x32xf32>
    %77 = vector.extract_strided_slice %76 {offsets = [0, 0], sizes = [1, 16], strides = [1, 1]} : vector<1x32xf32> to vector<1x16xf32>
    %c0_56 = arith.constant 0 : index
    %c0_57 = arith.constant 0 : index
    %78 = vector.load %arg15[%c0_56, %c0_57] : memref<8x32xf32, #tpu.memory_space<vmem>>, vector<1x16xf32>
    tpu.vector_store %arg15[%c0_56, %c0_57], %77 {strides = array<i32>} : memref<8x32xf32, #tpu.memory_space<vmem>>, vector<1x16xf32>,
    %79 = vector.extract_strided_slice %76 {offsets = [0, 16], sizes = [1, 16], strides = [1, 1]} : vector<1x32xf32> to vector<1x16xf32>
    %c7_58 = arith.constant 7 : index
    %c16 = arith.constant 16 : index
    %80 = vector.load %arg15[%c7_58, %c16] : memref<8x32xf32, #tpu.memory_space<vmem>>, vector<1x16xf32>
    tpu.vector_store %arg15[%c7_58, %c16], %79 {strides = array<i32>} : memref<8x32xf32, #tpu.memory_space<vmem>>, vector<1x16xf32>,
    %81 = vector.extract_strided_slice %45 {offsets = [1, 0], sizes = [1, 128], strides = [1, 1]} : vector<8x128xf32> to vector<1x128xf32>
    %cst_59 = arith.constant dense<0.000000e+00> : vector<1x128xf32>
    %82 = tpu.matmul %76, %46, %cst_59 {dimension_numbers = #tpu.dot_dimension_numbers<[1], [0], [0], [1], [0, 0, 1, 1], [], []>} : vector<1x32xf32>, vector<32x128xf32>, vector<1x128xf32> -> vector<1x128xf32>
    %83 = arith.addf %81, %82 : vector<1x128xf32>
    %84 = arith.mulf %83, %55 : vector<1x128xf32>
    %85 = math.tanh %84 : vector<1x128xf32>
    %86 = arith.mulf %85, %55 : vector<1x128xf32>
    %87 = arith.addf %86, %58 : vector<1x128xf32>
    %88 = vector.extract_strided_slice %87 {offsets = [0, 0], sizes = [1, 32], strides = [1, 1]} : vector<1x128xf32> to vector<1x32xf32>
    %89 = vector.extract_strided_slice %87 {offsets = [0, 32], sizes = [1, 32], strides = [1, 1]} : vector<1x128xf32> to vector<1x32xf32>
    %90 = vector.extract_strided_slice %87 {offsets = [0, 64], sizes = [1, 32], strides = [1, 1]} : vector<1x128xf32> to vector<1x32xf32>
    %91 = vector.extract_strided_slice %87 {offsets = [0, 96], sizes = [1, 32], strides = [1, 1]} : vector<1x128xf32> to vector<1x32xf32>
    %92 = arith.mulf %89, %74 : vector<1x32xf32>
    %93 = arith.mulf %88, %90 : vector<1x32xf32>
    %94 = arith.addf %92, %93 : vector<1x32xf32>
    %95 = math.tanh %94 : vector<1x32xf32>
    %96 = arith.mulf %91, %95 : vector<1x32xf32>
    %97 = vector.extract_strided_slice %96 {offsets = [0, 0], sizes = [1, 16], strides = [1, 1]} : vector<1x32xf32> to vector<1x16xf32>
    %c1_60 = arith.constant 1 : index
    %c0_61 = arith.constant 0 : index
    %98 = vector.load %arg15[%c1_60, %c0_61] : memref<8x32xf32, #tpu.memory_space<vmem>>, vector<1x16xf32>
    tpu.vector_store %arg15[%c1_60, %c0_61], %97 {strides = array<i32>} : memref<8x32xf32, #tpu.memory_space<vmem>>, vector<1x16xf32>,
    %99 = vector.extract_strided_slice %96 {offsets = [0, 16], sizes = [1, 16], strides = [1, 1]} : vector<1x32xf32> to vector<1x16xf32>
    %c6_62 = arith.constant 6 : index
    %c16_63 = arith.constant 16 : index
    %100 = vector.load %arg15[%c6_62, %c16_63] : memref<8x32xf32, #tpu.memory_space<vmem>>, vector<1x16xf32>
    tpu.vector_store %arg15[%c6_62, %c16_63], %99 {strides = array<i32>} : memref<8x32xf32, #tpu.memory_space<vmem>>, vector<1x16xf32>,
    %101 = vector.extract_strided_slice %45 {offsets = [2, 0], sizes = [1, 128], strides = [1, 1]} : vector<8x128xf32> to vector<1x128xf32>
    %cst_64 = arith.constant dense<0.000000e+00> : vector<1x128xf32>
    %102 = tpu.matmul %96, %46, %cst_64 {dimension_numbers = #tpu.dot_dimension_numbers<[1], [0], [0], [1], [0, 0, 1, 1], [], []>} : vector<1x32xf32>, vector<32x128xf32>, vector<1x128xf32> -> vector<1x128xf32>
    %103 = arith.addf %101, %102 : vector<1x128xf32>
    %104 = arith.mulf %103, %55 : vector<1x128xf32>
    %105 = math.tanh %104 : vector<1x128xf32>
    %106 = arith.mulf %105, %55 : vector<1x128xf32>
    %107 = arith.addf %106, %58 : vector<1x128xf32>
    %108 = vector.extract_strided_slice %107 {offsets = [0, 0], sizes = [1, 32], strides = [1, 1]} : vector<1x128xf32> to vector<1x32xf32>
    %109 = vector.extract_strided_slice %107 {offsets = [0, 32], sizes = [1, 32], strides = [1, 1]} : vector<1x128xf32> to vector<1x32xf32>
    %110 = vector.extract_strided_slice %107 {offsets = [0, 64], sizes = [1, 32], strides = [1, 1]} : vector<1x128xf32> to vector<1x32xf32>
    %111 = vector.extract_strided_slice %107 {offsets = [0, 96], sizes = [1, 32], strides = [1, 1]} : vector<1x128xf32> to vector<1x32xf32>
    %112 = arith.mulf %109, %94 : vector<1x32xf32>
    %113 = arith.mulf %108, %110 : vector<1x32xf32>
    %114 = arith.addf %112, %113 : vector<1x32xf32>
    %115 = math.tanh %114 : vector<1x32xf32>
    %116 = arith.mulf %111, %115 : vector<1x32xf32>
    %117 = vector.extract_strided_slice %116 {offsets = [0, 0], sizes = [1, 16], strides = [1, 1]} : vector<1x32xf32> to vector<1x16xf32>
    %c2_65 = arith.constant 2 : index
    %c0_66 = arith.constant 0 : index
    %118 = vector.load %arg15[%c2_65, %c0_66] : memref<8x32xf32, #tpu.memory_space<vmem>>, vector<1x16xf32>
    tpu.vector_store %arg15[%c2_65, %c0_66], %117 {strides = array<i32>} : memref<8x32xf32, #tpu.memory_space<vmem>>, vector<1x16xf32>,
    %119 = vector.extract_strided_slice %116 {offsets = [0, 16], sizes = [1, 16], strides = [1, 1]} : vector<1x32xf32> to vector<1x16xf32>
    %c5_67 = arith.constant 5 : index
    %c16_68 = arith.constant 16 : index
    %120 = vector.load %arg15[%c5_67, %c16_68] : memref<8x32xf32, #tpu.memory_space<vmem>>, vector<1x16xf32>
    tpu.vector_store %arg15[%c5_67, %c16_68], %119 {strides = array<i32>} : memref<8x32xf32, #tpu.memory_space<vmem>>, vector<1x16xf32>,
    %121 = vector.extract_strided_slice %45 {offsets = [3, 0], sizes = [1, 128], strides = [1, 1]} : vector<8x128xf32> to vector<1x128xf32>
    %cst_69 = arith.constant dense<0.000000e+00> : vector<1x128xf32>
    %122 = tpu.matmul %116, %46, %cst_69 {dimension_numbers = #tpu.dot_dimension_numbers<[1], [0], [0], [1], [0, 0, 1, 1], [], []>} : vector<1x32xf32>, vector<32x128xf32>, vector<1x128xf32> -> vector<1x128xf32>
    %123 = arith.addf %121, %122 : vector<1x128xf32>
    %124 = arith.mulf %123, %55 : vector<1x128xf32>
    %125 = math.tanh %124 : vector<1x128xf32>
    %126 = arith.mulf %125, %55 : vector<1x128xf32>
    %127 = arith.addf %126, %58 : vector<1x128xf32>
    %128 = vector.extract_strided_slice %127 {offsets = [0, 0], sizes = [1, 32], strides = [1, 1]} : vector<1x128xf32> to vector<1x32xf32>
    %129 = vector.extract_strided_slice %127 {offsets = [0, 32], sizes = [1, 32], strides = [1, 1]} : vector<1x128xf32> to vector<1x32xf32>
    %130 = vector.extract_strided_slice %127 {offsets = [0, 64], sizes = [1, 32], strides = [1, 1]} : vector<1x128xf32> to vector<1x32xf32>
    %131 = vector.extract_strided_slice %127 {offsets = [0, 96], sizes = [1, 32], strides = [1, 1]} : vector<1x128xf32> to vector<1x32xf32>
    %132 = arith.mulf %129, %114 : vector<1x32xf32>
    %133 = arith.mulf %128, %130 : vector<1x32xf32>
    %134 = arith.addf %132, %133 : vector<1x32xf32>
    %135 = math.tanh %134 : vector<1x32xf32>
    %136 = arith.mulf %131, %135 : vector<1x32xf32>
    %137 = vector.extract_strided_slice %136 {offsets = [0, 0], sizes = [1, 16], strides = [1, 1]} : vector<1x32xf32> to vector<1x16xf32>
    %c3_70 = arith.constant 3 : index
    %c0_71 = arith.constant 0 : index
    %138 = vector.load %arg15[%c3_70, %c0_71] : memref<8x32xf32, #tpu.memory_space<vmem>>, vector<1x16xf32>
    tpu.vector_store %arg15[%c3_70, %c0_71], %137 {strides = array<i32>} : memref<8x32xf32, #tpu.memory_space<vmem>>, vector<1x16xf32>,
    %139 = vector.extract_strided_slice %136 {offsets = [0, 16], sizes = [1, 16], strides = [1, 1]} : vector<1x32xf32> to vector<1x16xf32>
    %c4_72 = arith.constant 4 : index
    %c16_73 = arith.constant 16 : index
    %140 = vector.load %arg15[%c4_72, %c16_73] : memref<8x32xf32, #tpu.memory_space<vmem>>, vector<1x16xf32>
    tpu.vector_store %arg15[%c4_72, %c16_73], %139 {strides = array<i32>} : memref<8x32xf32, #tpu.memory_space<vmem>>, vector<1x16xf32>,
    %141 = vector.extract_strided_slice %45 {offsets = [4, 0], sizes = [1, 128], strides = [1, 1]} : vector<8x128xf32> to vector<1x128xf32>
    %cst_74 = arith.constant dense<0.000000e+00> : vector<1x128xf32>
    %142 = tpu.matmul %136, %46, %cst_74 {dimension_numbers = #tpu.dot_dimension_numbers<[1], [0], [0], [1], [0, 0, 1, 1], [], []>} : vector<1x32xf32>, vector<32x128xf32>, vector<1x128xf32> -> vector<1x128xf32>
    %143 = arith.addf %141, %142 : vector<1x128xf32>
    %144 = arith.mulf %143, %55 : vector<1x128xf32>
    %145 = math.tanh %144 : vector<1x128xf32>
    %146 = arith.mulf %145, %55 : vector<1x128xf32>
    %147 = arith.addf %146, %58 : vector<1x128xf32>
    %148 = vector.extract_strided_slice %147 {offsets = [0, 0], sizes = [1, 32], strides = [1, 1]} : vector<1x128xf32> to vector<1x32xf32>
    %149 = vector.extract_strided_slice %147 {offsets = [0, 32], sizes = [1, 32], strides = [1, 1]} : vector<1x128xf32> to vector<1x32xf32>
    %150 = vector.extract_strided_slice %147 {offsets = [0, 64], sizes = [1, 32], strides = [1, 1]} : vector<1x128xf32> to vector<1x32xf32>
    %151 = vector.extract_strided_slice %147 {offsets = [0, 96], sizes = [1, 32], strides = [1, 1]} : vector<1x128xf32> to vector<1x32xf32>
    %152 = arith.mulf %149, %134 : vector<1x32xf32>
    %153 = arith.mulf %148, %150 : vector<1x32xf32>
    %154 = arith.addf %152, %153 : vector<1x32xf32>
    %155 = math.tanh %154 : vector<1x32xf32>
    %156 = arith.mulf %151, %155 : vector<1x32xf32>
    %157 = vector.extract_strided_slice %156 {offsets = [0, 0], sizes = [1, 16], strides = [1, 1]} : vector<1x32xf32> to vector<1x16xf32>
    %c4_75 = arith.constant 4 : index
    %c0_76 = arith.constant 0 : index
    %158 = vector.load %arg15[%c4_75, %c0_76] : memref<8x32xf32, #tpu.memory_space<vmem>>, vector<1x16xf32>
    tpu.vector_store %arg15[%c4_75, %c0_76], %157 {strides = array<i32>} : memref<8x32xf32, #tpu.memory_space<vmem>>, vector<1x16xf32>,
    %159 = vector.extract_strided_slice %156 {offsets = [0, 16], sizes = [1, 16], strides = [1, 1]} : vector<1x32xf32> to vector<1x16xf32>
    %c3_77 = arith.constant 3 : index
    %c16_78 = arith.constant 16 : index
    %160 = vector.load %arg15[%c3_77, %c16_78] : memref<8x32xf32, #tpu.memory_space<vmem>>, vector<1x16xf32>
    tpu.vector_store %arg15[%c3_77, %c16_78], %159 {strides = array<i32>} : memref<8x32xf32, #tpu.memory_space<vmem>>, vector<1x16xf32>,
    %161 = vector.extract_strided_slice %45 {offsets = [5, 0], sizes = [1, 128], strides = [1, 1]} : vector<8x128xf32> to vector<1x128xf32>
    %cst_79 = arith.constant dense<0.000000e+00> : vector<1x128xf32>
    %162 = tpu.matmul %156, %46, %cst_79 {dimension_numbers = #tpu.dot_dimension_numbers<[1], [0], [0], [1], [0, 0, 1, 1], [], []>} : vector<1x32xf32>, vector<32x128xf32>, vector<1x128xf32> -> vector<1x128xf32>
    %163 = arith.addf %161, %162 : vector<1x128xf32>
    %164 = arith.mulf %163, %55 : vector<1x128xf32>
    %165 = math.tanh %164 : vector<1x128xf32>
    %166 = arith.mulf %165, %55 : vector<1x128xf32>
    %167 = arith.addf %166, %58 : vector<1x128xf32>
    %168 = vector.extract_strided_slice %167 {offsets = [0, 0], sizes = [1, 32], strides = [1, 1]} : vector<1x128xf32> to vector<1x32xf32>
    %169 = vector.extract_strided_slice %167 {offsets = [0, 32], sizes = [1, 32], strides = [1, 1]} : vector<1x128xf32> to vector<1x32xf32>
    %170 = vector.extract_strided_slice %167 {offsets = [0, 64], sizes = [1, 32], strides = [1, 1]} : vector<1x128xf32> to vector<1x32xf32>
    %171 = vector.extract_strided_slice %167 {offsets = [0, 96], sizes = [1, 32], strides = [1, 1]} : vector<1x128xf32> to vector<1x32xf32>
    %172 = arith.mulf %169, %154 : vector<1x32xf32>
    %173 = arith.mulf %168, %170 : vector<1x32xf32>
    %174 = arith.addf %172, %173 : vector<1x32xf32>
    %175 = math.tanh %174 : vector<1x32xf32>
    %176 = arith.mulf %171, %175 : vector<1x32xf32>
    %177 = vector.extract_strided_slice %176 {offsets = [0, 0], sizes = [1, 16], strides = [1, 1]} : vector<1x32xf32> to vector<1x16xf32>
    %c5_80 = arith.constant 5 : index
    %c0_81 = arith.constant 0 : index
    %178 = vector.load %arg15[%c5_80, %c0_81] : memref<8x32xf32, #tpu.memory_space<vmem>>, vector<1x16xf32>
    tpu.vector_store %arg15[%c5_80, %c0_81], %177 {strides = array<i32>} : memref<8x32xf32, #tpu.memory_space<vmem>>, vector<1x16xf32>,
    %179 = vector.extract_strided_slice %176 {offsets = [0, 16], sizes = [1, 16], strides = [1, 1]} : vector<1x32xf32> to vector<1x16xf32>
    %c2_82 = arith.constant 2 : index
    %c16_83 = arith.constant 16 : index
    %180 = vector.load %arg15[%c2_82, %c16_83] : memref<8x32xf32, #tpu.memory_space<vmem>>, vector<1x16xf32>
    tpu.vector_store %arg15[%c2_82, %c16_83], %179 {strides = array<i32>} : memref<8x32xf32, #tpu.memory_space<vmem>>, vector<1x16xf32>,
    %181 = vector.extract_strided_slice %45 {offsets = [6, 0], sizes = [1, 128], strides = [1, 1]} : vector<8x128xf32> to vector<1x128xf32>
    %cst_84 = arith.constant dense<0.000000e+00> : vector<1x128xf32>
    %182 = tpu.matmul %176, %46, %cst_84 {dimension_numbers = #tpu.dot_dimension_numbers<[1], [0], [0], [1], [0, 0, 1, 1], [], []>} : vector<1x32xf32>, vector<32x128xf32>, vector<1x128xf32> -> vector<1x128xf32>
    %183 = arith.addf %181, %182 : vector<1x128xf32>
    %184 = arith.mulf %183, %55 : vector<1x128xf32>
    %185 = math.tanh %184 : vector<1x128xf32>
    %186 = arith.mulf %185, %55 : vector<1x128xf32>
    %187 = arith.addf %186, %58 : vector<1x128xf32>
    %188 = vector.extract_strided_slice %187 {offsets = [0, 0], sizes = [1, 32], strides = [1, 1]} : vector<1x128xf32> to vector<1x32xf32>
    %189 = vector.extract_strided_slice %187 {offsets = [0, 32], sizes = [1, 32], strides = [1, 1]} : vector<1x128xf32> to vector<1x32xf32>
    %190 = vector.extract_strided_slice %187 {offsets = [0, 64], sizes = [1, 32], strides = [1, 1]} : vector<1x128xf32> to vector<1x32xf32>
    %191 = vector.extract_strided_slice %187 {offsets = [0, 96], sizes = [1, 32], strides = [1, 1]} : vector<1x128xf32> to vector<1x32xf32>
    %192 = arith.mulf %189, %174 : vector<1x32xf32>
    %193 = arith.mulf %188, %190 : vector<1x32xf32>
    %194 = arith.addf %192, %193 : vector<1x32xf32>
    %195 = math.tanh %194 : vector<1x32xf32>
    %196 = arith.mulf %191, %195 : vector<1x32xf32>
    %197 = vector.extract_strided_slice %196 {offsets = [0, 0], sizes = [1, 16], strides = [1, 1]} : vector<1x32xf32> to vector<1x16xf32>
    %c6_85 = arith.constant 6 : index
    %c0_86 = arith.constant 0 : index
    %198 = vector.load %arg15[%c6_85, %c0_86] : memref<8x32xf32, #tpu.memory_space<vmem>>, vector<1x16xf32>
    tpu.vector_store %arg15[%c6_85, %c0_86], %197 {strides = array<i32>} : memref<8x32xf32, #tpu.memory_space<vmem>>, vector<1x16xf32>,
    %199 = vector.extract_strided_slice %196 {offsets = [0, 16], sizes = [1, 16], strides = [1, 1]} : vector<1x32xf32> to vector<1x16xf32>
    %c1_87 = arith.constant 1 : index
    %c16_88 = arith.constant 16 : index
    %200 = vector.load %arg15[%c1_87, %c16_88] : memref<8x32xf32, #tpu.memory_space<vmem>>, vector<1x16xf32>
    tpu.vector_store %arg15[%c1_87, %c16_88], %199 {strides = array<i32>} : memref<8x32xf32, #tpu.memory_space<vmem>>, vector<1x16xf32>,
    %201 = vector.extract_strided_slice %45 {offsets = [7, 0], sizes = [1, 128], strides = [1, 1]} : vector<8x128xf32> to vector<1x128xf32>
    %cst_89 = arith.constant dense<0.000000e+00> : vector<1x128xf32>
    %202 = tpu.matmul %196, %46, %cst_89 {dimension_numbers = #tpu.dot_dimension_numbers<[1], [0], [0], [1], [0, 0, 1, 1], [], []>} : vector<1x32xf32>, vector<32x128xf32>, vector<1x128xf32> -> vector<1x128xf32>
    %203 = arith.addf %201, %202 : vector<1x128xf32>
    %204 = arith.mulf %203, %55 : vector<1x128xf32>
    %205 = math.tanh %204 : vector<1x128xf32>
    %206 = arith.mulf %205, %55 : vector<1x128xf32>
    %207 = arith.addf %206, %58 : vector<1x128xf32>
    %208 = vector.extract_strided_slice %207 {offsets = [0, 0], sizes = [1, 32], strides = [1, 1]} : vector<1x128xf32> to vector<1x32xf32>
    %209 = vector.extract_strided_slice %207 {offsets = [0, 32], sizes = [1, 32], strides = [1, 1]} : vector<1x128xf32> to vector<1x32xf32>
    %210 = vector.extract_strided_slice %207 {offsets = [0, 64], sizes = [1, 32], strides = [1, 1]} : vector<1x128xf32> to vector<1x32xf32>
    %211 = vector.extract_strided_slice %207 {offsets = [0, 96], sizes = [1, 32], strides = [1, 1]} : vector<1x128xf32> to vector<1x32xf32>
    %212 = arith.mulf %209, %194 : vector<1x32xf32>
    %213 = arith.mulf %208, %210 : vector<1x32xf32>
    %214 = arith.addf %212, %213 : vector<1x32xf32>
    %215 = math.tanh %214 : vector<1x32xf32>
    %216 = arith.mulf %211, %215 : vector<1x32xf32>
    %217 = vector.extract_strided_slice %216 {offsets = [0, 0], sizes = [1, 16], strides = [1, 1]} : vector<1x32xf32> to vector<1x16xf32>
    %c7_90 = arith.constant 7 : index
    %c0_91 = arith.constant 0 : index
    %218 = vector.load %arg15[%c7_90, %c0_91] : memref<8x32xf32, #tpu.memory_space<vmem>>, vector<1x16xf32>
    tpu.vector_store %arg15[%c7_90, %c0_91], %217 {strides = array<i32>} : memref<8x32xf32, #tpu.memory_space<vmem>>, vector<1x16xf32>,
    %219 = vector.extract_strided_slice %216 {offsets = [0, 16], sizes = [1, 16], strides = [1, 1]} : vector<1x32xf32> to vector<1x16xf32>
    %c0_92 = arith.constant 0 : index
    %c16_93 = arith.constant 16 : index
    %220 = vector.load %arg15[%c0_92, %c16_93] : memref<8x32xf32, #tpu.memory_space<vmem>>, vector<1x16xf32>
    tpu.vector_store %arg15[%c0_92, %c16_93], %219 {strides = array<i32>} : memref<8x32xf32, #tpu.memory_space<vmem>>, vector<1x16xf32>,
    %c0_94 = arith.constant 0 : index
    %c0_95 = arith.constant 0 : index
    %221 = vector.load %arg15[%c0_94, %c0_95] : memref<8x32xf32, #tpu.memory_space<vmem>>, vector<8x32xf32>
    %c0_96 = arith.constant 0 : index
    %c0_97 = arith.constant 0 : index
    %222 = vector.load %arg7[%c0_96, %c0_97] : memref<32x8xf32, #tpu.memory_space<vmem>>, vector<32x8xf32>
    %cst_98 = arith.constant dense<0.000000e+00> : vector<8x8xf32>
    %223 = tpu.matmul %221, %222, %cst_98 {dimension_numbers = #tpu.dot_dimension_numbers<[1], [0], [0], [1], [0, 0, 1, 1], [], []>} : vector<8x32xf32>, vector<32x8xf32>, vector<8x8xf32> -> vector<8x8xf32>
    %c0_99 = arith.constant 0 : index
    %c0_100 = arith.constant 0 : index
    %224 = vector.load %arg8[%c0_99, %c0_100] : memref<1x8xf32, #tpu.memory_space<vmem>>, vector<1x8xf32>
    %225 = vector.broadcast %224 : vector<1x8xf32> to vector<8x8xf32>
    %226 = arith.addf %223, %225 : vector<8x8xf32>
    %c0_101 = arith.constant 0 : index
    %c0_102 = arith.constant 0 : index
    %227 = vector.load %arg10[%c0_101, %c0_102] : memref<8x8xf32, #tpu.memory_space<vmem>>, vector<8x8xf32>
    tpu.vector_store %arg10[%c0_101, %c0_102], %226 {strides = array<i32>} : memref<8x8xf32, #tpu.memory_space<vmem>>, vector<8x8xf32>,
    %c0_103 = arith.constant 0 : index
    %c0_104 = arith.constant 0 : index
    %228 = vector.load %arg9[%c0_103, %c0_104] : memref<8x8xf32, #tpu.memory_space<vmem>>, vector<8x8xf32>
    %229 = tpu.iota {dimensions = array<i32: 0>} : vector<8x8xi32>
    %230 = tpu.iota {dimensions = array<i32: 1>} : vector<8x8xi32>
    %231 = arith.cmpi eq, %229, %230 : vector<8x8xi32>
    %232 = arith.extui %231 : vector<8x8xi1> to vector<8x8xi32>
    %233 = arith.sitofp %232 : vector<8x8xi32> to vector<8x8xf32>
    %234 = tpu.iota {dimensions = array<i32: 0>} : vector<8x1xi32>
    %235 = tpu.iota {dimensions = array<i32: 1>} : vector<1x8xi32>
    %c3_i32 = arith.constant 3 : i32
    %236 = vector.broadcast %c3_i32 : i32 to vector<8x1xi32>
    %237 = arith.cmpi eq, %234, %236 : vector<8x1xi32>
    %cst_105 = arith.constant 0.000000e+00 : f32
    %cst_106 = arith.constant -1.000000e+04 : f32
    %238 = vector.broadcast %cst_105 : f32 to vector<8x1xf32>
    %239 = vector.broadcast %cst_106 : f32 to vector<8x1xf32>
    %240 = arith.select %237, %238, %239 : vector<8x1xi1>, vector<8x1xf32>
    %241 = vector.broadcast %240 : vector<8x1xf32> to vector<8x8xf32>
    %242 = arith.addf %241, %228 : vector<8x8xf32>
    %cst_107 = arith.constant dense<0xFF800000> : vector<8xf32>
    %243 = vector.multi_reduction <maximumf>, %242, %cst_107 [0] : vector<8x8xf32> to vector<8xf32>
    %244 = vector.shape_cast %243 : vector<8xf32> to vector<1x8xf32>
    %245 = vector.broadcast %244 : vector<1x8xf32> to vector<8x8xf32>
    %246 = arith.cmpf oeq, %242, %245 : vector<8x8xf32>
    %c8_i32 = arith.constant 8 : i32
    %247 = vector.broadcast %c8_i32 : i32 to vector<8x8xi32>
    %248 = arith.select %246, %229, %247 : vector<8x8xi1>, vector<8x8xi32>
    %cst_108 = arith.constant dense<2147483647> : vector<8xi32>
    %249 = vector.multi_reduction <minsi>, %248, %cst_108 [0] : vector<8x8xi32> to vector<8xi32>
    %250 = vector.shape_cast %249 : vector<8xi32> to vector<1x8xi32>
    %c0_109 = arith.constant 0 : index
    %c0_110 = arith.constant 0 : index
    %251 = vector.load %arg16[%c0_109, %c0_110] : memref<8x8xi32, #tpu.memory_space<vmem>>, vector<1x8xi32>
    tpu.vector_store %arg16[%c0_109, %c0_110], %250 {strides = array<i32>} : memref<8x8xi32, #tpu.memory_space<vmem>>, vector<1x8xi32>,
    %252 = vector.extract_strided_slice %226 {offsets = [0, 0], sizes = [1, 8], strides = [1, 1]} : vector<8x8xf32> to vector<1x8xf32>
    %253 = arith.addf %244, %252 : vector<1x8xf32>
    %254 = vector.broadcast %253 : vector<1x8xf32> to vector<8x8xf32>
    %255 = arith.mulf %254, %233 : vector<8x8xf32>
    %cst_111 = arith.constant dense<0.000000e+00> : vector<8xf32>
    %256 = vector.multi_reduction <add>, %255, %cst_111 [1] : vector<8x8xf32> to vector<8xf32>
    %257 = vector.shape_cast %256 : vector<8xf32> to vector<8x1xf32>
    %258 = vector.broadcast %257 : vector<8x1xf32> to vector<8x8xf32>
    %259 = arith.addf %258, %228 : vector<8x8xf32>
    %cst_112 = arith.constant dense<0xFF800000> : vector<8xf32>
    %260 = vector.multi_reduction <maximumf>, %259, %cst_112 [0] : vector<8x8xf32> to vector<8xf32>
    %261 = vector.shape_cast %260 : vector<8xf32> to vector<1x8xf32>
    %262 = vector.broadcast %261 : vector<1x8xf32> to vector<8x8xf32>
    %263 = arith.cmpf oeq, %259, %262 : vector<8x8xf32>
    %c8_i32_113 = arith.constant 8 : i32
    %264 = vector.broadcast %c8_i32_113 : i32 to vector<8x8xi32>
    %265 = arith.select %263, %229, %264 : vector<8x8xi1>, vector<8x8xi32>
    %cst_114 = arith.constant dense<2147483647> : vector<8xi32>
    %266 = vector.multi_reduction <minsi>, %265, %cst_114 [0] : vector<8x8xi32> to vector<8xi32>
    %267 = vector.shape_cast %266 : vector<8xi32> to vector<1x8xi32>
    %c1_115 = arith.constant 1 : index
    %c0_116 = arith.constant 0 : index
    %268 = vector.load %arg16[%c1_115, %c0_116] : memref<8x8xi32, #tpu.memory_space<vmem>>, vector<1x8xi32>
    tpu.vector_store %arg16[%c1_115, %c0_116], %267 {strides = array<i32>} : memref<8x8xi32, #tpu.memory_space<vmem>>, vector<1x8xi32>,
    %269 = vector.extract_strided_slice %226 {offsets = [1, 0], sizes = [1, 8], strides = [1, 1]} : vector<8x8xf32> to vector<1x8xf32>
    %270 = arith.addf %261, %269 : vector<1x8xf32>
    %271 = vector.broadcast %270 : vector<1x8xf32> to vector<8x8xf32>
    %272 = arith.mulf %271, %233 : vector<8x8xf32>
    %cst_117 = arith.constant dense<0.000000e+00> : vector<8xf32>
    %273 = vector.multi_reduction <add>, %272, %cst_117 [1] : vector<8x8xf32> to vector<8xf32>
    %274 = vector.shape_cast %273 : vector<8xf32> to vector<8x1xf32>
    %275 = vector.broadcast %274 : vector<8x1xf32> to vector<8x8xf32>
    %276 = arith.addf %275, %228 : vector<8x8xf32>
    %cst_118 = arith.constant dense<0xFF800000> : vector<8xf32>
    %277 = vector.multi_reduction <maximumf>, %276, %cst_118 [0] : vector<8x8xf32> to vector<8xf32>
    %278 = vector.shape_cast %277 : vector<8xf32> to vector<1x8xf32>
    %279 = vector.broadcast %278 : vector<1x8xf32> to vector<8x8xf32>
    %280 = arith.cmpf oeq, %276, %279 : vector<8x8xf32>
    %c8_i32_119 = arith.constant 8 : i32
    %281 = vector.broadcast %c8_i32_119 : i32 to vector<8x8xi32>
    %282 = arith.select %280, %229, %281 : vector<8x8xi1>, vector<8x8xi32>
    %cst_120 = arith.constant dense<2147483647> : vector<8xi32>
    %283 = vector.multi_reduction <minsi>, %282, %cst_120 [0] : vector<8x8xi32> to vector<8xi32>
    %284 = vector.shape_cast %283 : vector<8xi32> to vector<1x8xi32>
    %c2_121 = arith.constant 2 : index
    %c0_122 = arith.constant 0 : index
    %285 = vector.load %arg16[%c2_121, %c0_122] : memref<8x8xi32, #tpu.memory_space<vmem>>, vector<1x8xi32>
    tpu.vector_store %arg16[%c2_121, %c0_122], %284 {strides = array<i32>} : memref<8x8xi32, #tpu.memory_space<vmem>>, vector<1x8xi32>,
    %286 = vector.extract_strided_slice %226 {offsets = [2, 0], sizes = [1, 8], strides = [1, 1]} : vector<8x8xf32> to vector<1x8xf32>
    %287 = arith.addf %278, %286 : vector<1x8xf32>
    %288 = vector.broadcast %287 : vector<1x8xf32> to vector<8x8xf32>
    %289 = arith.mulf %288, %233 : vector<8x8xf32>
    %cst_123 = arith.constant dense<0.000000e+00> : vector<8xf32>
    %290 = vector.multi_reduction <add>, %289, %cst_123 [1] : vector<8x8xf32> to vector<8xf32>
    %291 = vector.shape_cast %290 : vector<8xf32> to vector<8x1xf32>
    %292 = vector.broadcast %291 : vector<8x1xf32> to vector<8x8xf32>
    %293 = arith.addf %292, %228 : vector<8x8xf32>
    %cst_124 = arith.constant dense<0xFF800000> : vector<8xf32>
    %294 = vector.multi_reduction <maximumf>, %293, %cst_124 [0] : vector<8x8xf32> to vector<8xf32>
    %295 = vector.shape_cast %294 : vector<8xf32> to vector<1x8xf32>
    %296 = vector.broadcast %295 : vector<1x8xf32> to vector<8x8xf32>
    %297 = arith.cmpf oeq, %293, %296 : vector<8x8xf32>
    %c8_i32_125 = arith.constant 8 : i32
    %298 = vector.broadcast %c8_i32_125 : i32 to vector<8x8xi32>
    %299 = arith.select %297, %229, %298 : vector<8x8xi1>, vector<8x8xi32>
    %cst_126 = arith.constant dense<2147483647> : vector<8xi32>
    %300 = vector.multi_reduction <minsi>, %299, %cst_126 [0] : vector<8x8xi32> to vector<8xi32>
    %301 = vector.shape_cast %300 : vector<8xi32> to vector<1x8xi32>
    %c3_127 = arith.constant 3 : index
    %c0_128 = arith.constant 0 : index
    %302 = vector.load %arg16[%c3_127, %c0_128] : memref<8x8xi32, #tpu.memory_space<vmem>>, vector<1x8xi32>
    tpu.vector_store %arg16[%c3_127, %c0_128], %301 {strides = array<i32>} : memref<8x8xi32, #tpu.memory_space<vmem>>, vector<1x8xi32>,
    %303 = vector.extract_strided_slice %226 {offsets = [3, 0], sizes = [1, 8], strides = [1, 1]} : vector<8x8xf32> to vector<1x8xf32>
    %304 = arith.addf %295, %303 : vector<1x8xf32>
    %305 = vector.broadcast %304 : vector<1x8xf32> to vector<8x8xf32>
    %306 = arith.mulf %305, %233 : vector<8x8xf32>
    %cst_129 = arith.constant dense<0.000000e+00> : vector<8xf32>
    %307 = vector.multi_reduction <add>, %306, %cst_129 [1] : vector<8x8xf32> to vector<8xf32>
    %308 = vector.shape_cast %307 : vector<8xf32> to vector<8x1xf32>
    %309 = vector.broadcast %308 : vector<8x1xf32> to vector<8x8xf32>
    %310 = arith.addf %309, %228 : vector<8x8xf32>
    %cst_130 = arith.constant dense<0xFF800000> : vector<8xf32>
    %311 = vector.multi_reduction <maximumf>, %310, %cst_130 [0] : vector<8x8xf32> to vector<8xf32>
    %312 = vector.shape_cast %311 : vector<8xf32> to vector<1x8xf32>
    %313 = vector.broadcast %312 : vector<1x8xf32> to vector<8x8xf32>
    %314 = arith.cmpf oeq, %310, %313 : vector<8x8xf32>
    %c8_i32_131 = arith.constant 8 : i32
    %315 = vector.broadcast %c8_i32_131 : i32 to vector<8x8xi32>
    %316 = arith.select %314, %229, %315 : vector<8x8xi1>, vector<8x8xi32>
    %cst_132 = arith.constant dense<2147483647> : vector<8xi32>
    %317 = vector.multi_reduction <minsi>, %316, %cst_132 [0] : vector<8x8xi32> to vector<8xi32>
    %318 = vector.shape_cast %317 : vector<8xi32> to vector<1x8xi32>
    %c4_133 = arith.constant 4 : index
    %c0_134 = arith.constant 0 : index
    %319 = vector.load %arg16[%c4_133, %c0_134] : memref<8x8xi32, #tpu.memory_space<vmem>>, vector<1x8xi32>
    tpu.vector_store %arg16[%c4_133, %c0_134], %318 {strides = array<i32>} : memref<8x8xi32, #tpu.memory_space<vmem>>, vector<1x8xi32>,
    %320 = vector.extract_strided_slice %226 {offsets = [4, 0], sizes = [1, 8], strides = [1, 1]} : vector<8x8xf32> to vector<1x8xf32>
    %321 = arith.addf %312, %320 : vector<1x8xf32>
    %322 = vector.broadcast %321 : vector<1x8xf32> to vector<8x8xf32>
    %323 = arith.mulf %322, %233 : vector<8x8xf32>
    %cst_135 = arith.constant dense<0.000000e+00> : vector<8xf32>
    %324 = vector.multi_reduction <add>, %323, %cst_135 [1] : vector<8x8xf32> to vector<8xf32>
    %325 = vector.shape_cast %324 : vector<8xf32> to vector<8x1xf32>
    %326 = vector.broadcast %325 : vector<8x1xf32> to vector<8x8xf32>
    %327 = arith.addf %326, %228 : vector<8x8xf32>
    %cst_136 = arith.constant dense<0xFF800000> : vector<8xf32>
    %328 = vector.multi_reduction <maximumf>, %327, %cst_136 [0] : vector<8x8xf32> to vector<8xf32>
    %329 = vector.shape_cast %328 : vector<8xf32> to vector<1x8xf32>
    %330 = vector.broadcast %329 : vector<1x8xf32> to vector<8x8xf32>
    %331 = arith.cmpf oeq, %327, %330 : vector<8x8xf32>
    %c8_i32_137 = arith.constant 8 : i32
    %332 = vector.broadcast %c8_i32_137 : i32 to vector<8x8xi32>
    %333 = arith.select %331, %229, %332 : vector<8x8xi1>, vector<8x8xi32>
    %cst_138 = arith.constant dense<2147483647> : vector<8xi32>
    %334 = vector.multi_reduction <minsi>, %333, %cst_138 [0] : vector<8x8xi32> to vector<8xi32>
    %335 = vector.shape_cast %334 : vector<8xi32> to vector<1x8xi32>
    %c5_139 = arith.constant 5 : index
    %c0_140 = arith.constant 0 : index
    %336 = vector.load %arg16[%c5_139, %c0_140] : memref<8x8xi32, #tpu.memory_space<vmem>>, vector<1x8xi32>
    tpu.vector_store %arg16[%c5_139, %c0_140], %335 {strides = array<i32>} : memref<8x8xi32, #tpu.memory_space<vmem>>, vector<1x8xi32>,
    %337 = vector.extract_strided_slice %226 {offsets = [5, 0], sizes = [1, 8], strides = [1, 1]} : vector<8x8xf32> to vector<1x8xf32>
    %338 = arith.addf %329, %337 : vector<1x8xf32>
    %339 = vector.broadcast %338 : vector<1x8xf32> to vector<8x8xf32>
    %340 = arith.mulf %339, %233 : vector<8x8xf32>
    %cst_141 = arith.constant dense<0.000000e+00> : vector<8xf32>
    %341 = vector.multi_reduction <add>, %340, %cst_141 [1] : vector<8x8xf32> to vector<8xf32>
    %342 = vector.shape_cast %341 : vector<8xf32> to vector<8x1xf32>
    %343 = vector.broadcast %342 : vector<8x1xf32> to vector<8x8xf32>
    %344 = arith.addf %343, %228 : vector<8x8xf32>
    %cst_142 = arith.constant dense<0xFF800000> : vector<8xf32>
    %345 = vector.multi_reduction <maximumf>, %344, %cst_142 [0] : vector<8x8xf32> to vector<8xf32>
    %346 = vector.shape_cast %345 : vector<8xf32> to vector<1x8xf32>
    %347 = vector.broadcast %346 : vector<1x8xf32> to vector<8x8xf32>
    %348 = arith.cmpf oeq, %344, %347 : vector<8x8xf32>
    %c8_i32_143 = arith.constant 8 : i32
    %349 = vector.broadcast %c8_i32_143 : i32 to vector<8x8xi32>
    %350 = arith.select %348, %229, %349 : vector<8x8xi1>, vector<8x8xi32>
    %cst_144 = arith.constant dense<2147483647> : vector<8xi32>
    %351 = vector.multi_reduction <minsi>, %350, %cst_144 [0] : vector<8x8xi32> to vector<8xi32>
    %352 = vector.shape_cast %351 : vector<8xi32> to vector<1x8xi32>
    %c6_145 = arith.constant 6 : index
    %c0_146 = arith.constant 0 : index
    %353 = vector.load %arg16[%c6_145, %c0_146] : memref<8x8xi32, #tpu.memory_space<vmem>>, vector<1x8xi32>
    tpu.vector_store %arg16[%c6_145, %c0_146], %352 {strides = array<i32>} : memref<8x8xi32, #tpu.memory_space<vmem>>, vector<1x8xi32>,
    %354 = vector.extract_strided_slice %226 {offsets = [6, 0], sizes = [1, 8], strides = [1, 1]} : vector<8x8xf32> to vector<1x8xf32>
    %355 = arith.addf %346, %354 : vector<1x8xf32>
    %356 = vector.broadcast %355 : vector<1x8xf32> to vector<8x8xf32>
    %357 = arith.mulf %356, %233 : vector<8x8xf32>
    %cst_147 = arith.constant dense<0.000000e+00> : vector<8xf32>
    %358 = vector.multi_reduction <add>, %357, %cst_147 [1] : vector<8x8xf32> to vector<8xf32>
    %359 = vector.shape_cast %358 : vector<8xf32> to vector<8x1xf32>
    %360 = vector.broadcast %359 : vector<8x1xf32> to vector<8x8xf32>
    %361 = arith.addf %360, %228 : vector<8x8xf32>
    %cst_148 = arith.constant dense<0xFF800000> : vector<8xf32>
    %362 = vector.multi_reduction <maximumf>, %361, %cst_148 [0] : vector<8x8xf32> to vector<8xf32>
    %363 = vector.shape_cast %362 : vector<8xf32> to vector<1x8xf32>
    %364 = vector.broadcast %363 : vector<1x8xf32> to vector<8x8xf32>
    %365 = arith.cmpf oeq, %361, %364 : vector<8x8xf32>
    %c8_i32_149 = arith.constant 8 : i32
    %366 = vector.broadcast %c8_i32_149 : i32 to vector<8x8xi32>
    %367 = arith.select %365, %229, %366 : vector<8x8xi1>, vector<8x8xi32>
    %cst_150 = arith.constant dense<2147483647> : vector<8xi32>
    %368 = vector.multi_reduction <minsi>, %367, %cst_150 [0] : vector<8x8xi32> to vector<8xi32>
    %369 = vector.shape_cast %368 : vector<8xi32> to vector<1x8xi32>
    %c7_151 = arith.constant 7 : index
    %c0_152 = arith.constant 0 : index
    %370 = vector.load %arg16[%c7_151, %c0_152] : memref<8x8xi32, #tpu.memory_space<vmem>>, vector<1x8xi32>
    tpu.vector_store %arg16[%c7_151, %c0_152], %369 {strides = array<i32>} : memref<8x8xi32, #tpu.memory_space<vmem>>, vector<1x8xi32>,
    %371 = vector.extract_strided_slice %226 {offsets = [7, 0], sizes = [1, 8], strides = [1, 1]} : vector<8x8xf32> to vector<1x8xf32>
    %372 = arith.addf %363, %371 : vector<1x8xf32>
    %373 = vector.broadcast %372 : vector<1x8xf32> to vector<8x8xf32>
    %374 = arith.mulf %373, %233 : vector<8x8xf32>
    %cst_153 = arith.constant dense<0.000000e+00> : vector<8xf32>
    %375 = vector.multi_reduction <add>, %374, %cst_153 [1] : vector<8x8xf32> to vector<8xf32>
    %376 = vector.shape_cast %375 : vector<8xf32> to vector<8x1xf32>
    %377 = vector.extract_strided_slice %228 {offsets = [0, 4], sizes = [8, 1], strides = [1, 1]} : vector<8x8xf32> to vector<8x1xf32>
    %378 = arith.addf %376, %377 : vector<8x1xf32>
    %cst_154 = arith.constant dense<0xFF800000> : vector<1xf32>
    %379 = vector.multi_reduction <maximumf>, %378, %cst_154 [0] : vector<8x1xf32> to vector<1xf32>
    %380 = vector.shape_cast %379 : vector<1xf32> to vector<1x1xf32>
    %381 = vector.broadcast %380 : vector<1x1xf32> to vector<8x1xf32>
    %382 = arith.cmpf oeq, %378, %381 : vector<8x1xf32>
    %c8_i32_155 = arith.constant 8 : i32
    %383 = vector.broadcast %c8_i32_155 : i32 to vector<8x1xi32>
    %384 = arith.select %382, %234, %383 : vector<8x1xi1>, vector<8x1xi32>
    %cst_156 = arith.constant dense<2147483647> : vector<1xi32>
    %385 = vector.multi_reduction <minsi>, %384, %cst_156 [0] : vector<8x1xi32> to vector<1xi32>
    %386 = vector.shape_cast %385 : vector<1xi32> to vector<1x1xi32>
    %387 = vector.shape_cast %380 : vector<1x1xf32> to vector<1x1xf32>
    %388 = vector.broadcast %387 : vector<1x1xf32> to vector<1x128xf32>
    %c0_157 = arith.constant 0 : index
    %c0_158 = arith.constant 0 : index
    %389 = vector.load %arg12[%c0_157, %c0_158] : memref<1x128xf32, #tpu.memory_space<vmem>>, vector<1x128xf32>
    tpu.vector_store %arg12[%c0_157, %c0_158], %388 {strides = array<i32>} : memref<1x128xf32, #tpu.memory_space<vmem>>, vector<1x128xf32>,
    %390 = vector.shape_cast %386 : vector<1x1xi32> to vector<1x1xi32>
    %391 = vector.broadcast %390 : vector<1x1xi32> to vector<1x128xi32>
    %c7_159 = arith.constant 7 : index
    %c0_160 = arith.constant 0 : index
    %392 = vector.load %arg11[%c7_159, %c0_160] : memref<8x128xi32, #tpu.memory_space<vmem>>, vector<1x128xi32>
    tpu.vector_store %arg11[%c7_159, %c0_160], %391 {strides = array<i32>} : memref<8x128xi32, #tpu.memory_space<vmem>>, vector<1x128xi32>,
    %393 = vector.broadcast %386 : vector<1x1xi32> to vector<1x8xi32>
    %394 = arith.cmpi eq, %235, %393 : vector<1x8xi32>
    %395 = arith.extui %394 : vector<1x8xi1> to vector<1x8xi32>
    %c7_161 = arith.constant 7 : index
    %c0_162 = arith.constant 0 : index
    %396 = vector.load %arg16[%c7_161, %c0_162] : memref<8x8xi32, #tpu.memory_space<vmem>>, vector<1x8xi32>
    %397 = arith.muli %396, %395 : vector<1x8xi32>
    %cst_163 = arith.constant dense<0> : vector<1xi32>
    %398 = vector.multi_reduction <add>, %397, %cst_163 [1] : vector<1x8xi32> to vector<1xi32>
    %399 = vector.shape_cast %398 : vector<1xi32> to vector<1x1xi32>
    %400 = vector.shape_cast %399 : vector<1x1xi32> to vector<1x1xi32>
    %401 = vector.broadcast %400 : vector<1x1xi32> to vector<1x128xi32>
    %c6_164 = arith.constant 6 : index
    %c0_165 = arith.constant 0 : index
    %402 = vector.load %arg11[%c6_164, %c0_165] : memref<8x128xi32, #tpu.memory_space<vmem>>, vector<1x128xi32>
    tpu.vector_store %arg11[%c6_164, %c0_165], %401 {strides = array<i32>} : memref<8x128xi32, #tpu.memory_space<vmem>>, vector<1x128xi32>,
    %403 = vector.broadcast %399 : vector<1x1xi32> to vector<1x8xi32>
    %404 = arith.cmpi eq, %235, %403 : vector<1x8xi32>
    %405 = arith.extui %404 : vector<1x8xi1> to vector<1x8xi32>
    %c6_166 = arith.constant 6 : index
    %c0_167 = arith.constant 0 : index
    %406 = vector.load %arg16[%c6_166, %c0_167] : memref<8x8xi32, #tpu.memory_space<vmem>>, vector<1x8xi32>
    %407 = arith.muli %406, %405 : vector<1x8xi32>
    %cst_168 = arith.constant dense<0> : vector<1xi32>
    %408 = vector.multi_reduction <add>, %407, %cst_168 [1] : vector<1x8xi32> to vector<1xi32>
    %409 = vector.shape_cast %408 : vector<1xi32> to vector<1x1xi32>
    %410 = vector.shape_cast %409 : vector<1x1xi32> to vector<1x1xi32>
    %411 = vector.broadcast %410 : vector<1x1xi32> to vector<1x128xi32>
    %c5_169 = arith.constant 5 : index
    %c0_170 = arith.constant 0 : index
    %412 = vector.load %arg11[%c5_169, %c0_170] : memref<8x128xi32, #tpu.memory_space<vmem>>, vector<1x128xi32>
    tpu.vector_store %arg11[%c5_169, %c0_170], %411 {strides = array<i32>} : memref<8x128xi32, #tpu.memory_space<vmem>>, vector<1x128xi32>,
    %413 = vector.broadcast %409 : vector<1x1xi32> to vector<1x8xi32>
    %414 = arith.cmpi eq, %235, %413 : vector<1x8xi32>
    %415 = arith.extui %414 : vector<1x8xi1> to vector<1x8xi32>
    %c5_171 = arith.constant 5 : index
    %c0_172 = arith.constant 0 : index
    %416 = vector.load %arg16[%c5_171, %c0_172] : memref<8x8xi32, #tpu.memory_space<vmem>>, vector<1x8xi32>
    %417 = arith.muli %416, %415 : vector<1x8xi32>
    %cst_173 = arith.constant dense<0> : vector<1xi32>
    %418 = vector.multi_reduction <add>, %417, %cst_173 [1] : vector<1x8xi32> to vector<1xi32>
    %419 = vector.shape_cast %418 : vector<1xi32> to vector<1x1xi32>
    %420 = vector.shape_cast %419 : vector<1x1xi32> to vector<1x1xi32>
    %421 = vector.broadcast %420 : vector<1x1xi32> to vector<1x128xi32>
    %c4_174 = arith.constant 4 : index
    %c0_175 = arith.constant 0 : index
    %422 = vector.load %arg11[%c4_174, %c0_175] : memref<8x128xi32, #tpu.memory_space<vmem>>, vector<1x128xi32>
    tpu.vector_store %arg11[%c4_174, %c0_175], %421 {strides = array<i32>} : memref<8x128xi32, #tpu.memory_space<vmem>>, vector<1x128xi32>,
    %423 = vector.broadcast %419 : vector<1x1xi32> to vector<1x8xi32>
    %424 = arith.cmpi eq, %235, %423 : vector<1x8xi32>
    %425 = arith.extui %424 : vector<1x8xi1> to vector<1x8xi32>
    %c4_176 = arith.constant 4 : index
    %c0_177 = arith.constant 0 : index
    %426 = vector.load %arg16[%c4_176, %c0_177] : memref<8x8xi32, #tpu.memory_space<vmem>>, vector<1x8xi32>
    %427 = arith.muli %426, %425 : vector<1x8xi32>
    %cst_178 = arith.constant dense<0> : vector<1xi32>
    %428 = vector.multi_reduction <add>, %427, %cst_178 [1] : vector<1x8xi32> to vector<1xi32>
    %429 = vector.shape_cast %428 : vector<1xi32> to vector<1x1xi32>
    %430 = vector.shape_cast %429 : vector<1x1xi32> to vector<1x1xi32>
    %431 = vector.broadcast %430 : vector<1x1xi32> to vector<1x128xi32>
    %c3_179 = arith.constant 3 : index
    %c0_180 = arith.constant 0 : index
    %432 = vector.load %arg11[%c3_179, %c0_180] : memref<8x128xi32, #tpu.memory_space<vmem>>, vector<1x128xi32>
    tpu.vector_store %arg11[%c3_179, %c0_180], %431 {strides = array<i32>} : memref<8x128xi32, #tpu.memory_space<vmem>>, vector<1x128xi32>,
    %433 = vector.broadcast %429 : vector<1x1xi32> to vector<1x8xi32>
    %434 = arith.cmpi eq, %235, %433 : vector<1x8xi32>
    %435 = arith.extui %434 : vector<1x8xi1> to vector<1x8xi32>
    %c3_181 = arith.constant 3 : index
    %c0_182 = arith.constant 0 : index
    %436 = vector.load %arg16[%c3_181, %c0_182] : memref<8x8xi32, #tpu.memory_space<vmem>>, vector<1x8xi32>
    %437 = arith.muli %436, %435 : vector<1x8xi32>
    %cst_183 = arith.constant dense<0> : vector<1xi32>
    %438 = vector.multi_reduction <add>, %437, %cst_183 [1] : vector<1x8xi32> to vector<1xi32>
    %439 = vector.shape_cast %438 : vector<1xi32> to vector<1x1xi32>
    %440 = vector.shape_cast %439 : vector<1x1xi32> to vector<1x1xi32>
    %441 = vector.broadcast %440 : vector<1x1xi32> to vector<1x128xi32>
    %c2_184 = arith.constant 2 : index
    %c0_185 = arith.constant 0 : index
    %442 = vector.load %arg11[%c2_184, %c0_185] : memref<8x128xi32, #tpu.memory_space<vmem>>, vector<1x128xi32>
    tpu.vector_store %arg11[%c2_184, %c0_185], %441 {strides = array<i32>} : memref<8x128xi32, #tpu.memory_space<vmem>>, vector<1x128xi32>,
    %443 = vector.broadcast %439 : vector<1x1xi32> to vector<1x8xi32>
    %444 = arith.cmpi eq, %235, %443 : vector<1x8xi32>
    %445 = arith.extui %444 : vector<1x8xi1> to vector<1x8xi32>
    %c2_186 = arith.constant 2 : index
    %c0_187 = arith.constant 0 : index
    %446 = vector.load %arg16[%c2_186, %c0_187] : memref<8x8xi32, #tpu.memory_space<vmem>>, vector<1x8xi32>
    %447 = arith.muli %446, %445 : vector<1x8xi32>
    %cst_188 = arith.constant dense<0> : vector<1xi32>
    %448 = vector.multi_reduction <add>, %447, %cst_188 [1] : vector<1x8xi32> to vector<1xi32>
    %449 = vector.shape_cast %448 : vector<1xi32> to vector<1x1xi32>
    %450 = vector.shape_cast %449 : vector<1x1xi32> to vector<1x1xi32>
    %451 = vector.broadcast %450 : vector<1x1xi32> to vector<1x128xi32>
    %c1_189 = arith.constant 1 : index
    %c0_190 = arith.constant 0 : index
    %452 = vector.load %arg11[%c1_189, %c0_190] : memref<8x128xi32, #tpu.memory_space<vmem>>, vector<1x128xi32>
    tpu.vector_store %arg11[%c1_189, %c0_190], %451 {strides = array<i32>} : memref<8x128xi32, #tpu.memory_space<vmem>>, vector<1x128xi32>,
    %453 = vector.broadcast %449 : vector<1x1xi32> to vector<1x8xi32>
    %454 = arith.cmpi eq, %235, %453 : vector<1x8xi32>
    %455 = arith.extui %454 : vector<1x8xi1> to vector<1x8xi32>
    %c1_191 = arith.constant 1 : index
    %c0_192 = arith.constant 0 : index
    %456 = vector.load %arg16[%c1_191, %c0_192] : memref<8x8xi32, #tpu.memory_space<vmem>>, vector<1x8xi32>
    %457 = arith.muli %456, %455 : vector<1x8xi32>
    %cst_193 = arith.constant dense<0> : vector<1xi32>
    %458 = vector.multi_reduction <add>, %457, %cst_193 [1] : vector<1x8xi32> to vector<1xi32>
    %459 = vector.shape_cast %458 : vector<1xi32> to vector<1x1xi32>
    %460 = vector.shape_cast %459 : vector<1x1xi32> to vector<1x1xi32>
    %461 = vector.broadcast %460 : vector<1x1xi32> to vector<1x128xi32>
    %c0_194 = arith.constant 0 : index
    %c0_195 = arith.constant 0 : index
    %462 = vector.load %arg11[%c0_194, %c0_195] : memref<8x128xi32, #tpu.memory_space<vmem>>, vector<1x128xi32>
    tpu.vector_store %arg11[%c0_194, %c0_195], %461 {strides = array<i32>} : memref<8x128xi32, #tpu.memory_space<vmem>>, vector<1x128xi32>,
    %463 = vector.broadcast %459 : vector<1x1xi32> to vector<1x8xi32>
    %464 = arith.cmpi eq, %235, %463 : vector<1x8xi32>
    %465 = arith.extui %464 : vector<1x8xi1> to vector<1x8xi32>
    %c0_196 = arith.constant 0 : index
    %c0_197 = arith.constant 0 : index
    %466 = vector.load %arg16[%c0_196, %c0_197] : memref<8x8xi32, #tpu.memory_space<vmem>>, vector<1x8xi32>
    %467 = arith.muli %466, %465 : vector<1x8xi32>
    %cst_198 = arith.constant dense<0> : vector<1xi32>
    %468 = vector.multi_reduction <add>, %467, %cst_198 [1] : vector<1x8xi32> to vector<1xi32>
    %469 = vector.shape_cast %468 : vector<1xi32> to vector<1x1xi32>
    %470 = vector.shape_cast %469 : vector<1x1xi32> to vector<1x1xi32>
    %471 = vector.broadcast %470 : vector<1x1xi32> to vector<1x128xi32>
    %c0_199 = arith.constant 0 : index
    %c0_200 = arith.constant 0 : index
    %472 = vector.load %arg13[%c0_199, %c0_200] : memref<1x128xi32, #tpu.memory_space<vmem>>, vector<1x128xi32>
    tpu.vector_store %arg13[%c0_199, %c0_200], %471 {strides = array<i32>} : memref<1x128xi32, #tpu.memory_space<vmem>>, vector<1x128xi32>,
    return
  }
}

</mosaic_0001>

<llo_original>
// kernel: tpu_custom_call.1
$region0: #{tpu_custom_call.1}
  #allocation0 [shape = 'u32[]', space=smem, size = 0x4, offset = 0x4, fixed_abs, tag = 'smem constant byte address 0x4 - core index']
  #allocation1 [shape = 'u32[144,128]{1,0:T(1,128)}', space=vmem, size = 0x12000, scoped, tag = 'internal scratch']
  #allocation2 [shape = 'f32[8,64]{1,0:T(8,128)}', space=vmem, size = 0x1000, scoped, tag = 'scratch operand']
  #allocation3 [shape = 'f32[8,32]{1,0:T(8,128)}', space=vmem, size = 0x1000, scoped, tag = 'scratch operand']
  #allocation4 [shape = 's32[8,8]{1,0:T(8,128)}', space=vmem, size = 0x1000, scoped, tag = 'scratch operand']
  %s0 = inlined_call_operand.vmem [shape: s32[8], index: 0, kind: input, shape index: {}]
  %s1 = inlined_call_operand.hbm [shape: f32[24,32], index: 1, kind: input, shape index: {}]
  %s2 = inlined_call_operand.hbm [shape: f32[64,128], index: 2, kind: input, shape index: {}]
  %s3 = inlined_call_operand.vmem [shape: f32[1,128], index: 3, kind: input, shape index: {}]
  %s4 = inlined_call_operand.vmem [shape: f32[32,128], index: 4, kind: input, shape index: {}]
  %s5 = inlined_call_operand.vmem [shape: f32[1,32], index: 5, kind: input, shape index: {}]
  %s6 = inlined_call_operand.vmem [shape: f32[1,32], index: 6, kind: input, shape index: {}]
  %s7 = inlined_call_operand.vmem [shape: f32[32,8], index: 7, kind: input, shape index: {}]
  %s8 = inlined_call_operand.vmem [shape: f32[1,8], index: 8, kind: input, shape index: {}]
  %s9 = inlined_call_operand.vmem [shape: f32[8,8], index: 9, kind: input, shape index: {}]
  %s10 = inlined_call_operand.hbm [shape: f32[8,8], index: 10, kind: output, shape index: {0}]
  %s11 = inlined_call_operand.hbm [shape: s32[8,128], index: 11, kind: output, shape index: {1}]
  %s12 = inlined_call_operand.hbm [shape: f32[1,128], index: 12, kind: output, shape index: {2}]
  %s13 = inlined_call_operand.hbm [shape: s32[1,128], index: 13, kind: output, shape index: {3}]
  %14 = xla_tuple %s10, %s11, %s12, %s13
  %s15 = sld [smem:[#allocation0]]
  $region86: #{tpu_custom_call.1} parent=0
    _
  %s17 = ssub.s32 1, %s15
  %s18 = scalar_select 0, %s17, %s15
  $region1: #{tpu_custom_call.1} parent=0
    #allocation5 [shape = 'u8[512]{0}', space=smem, size = 0x200, scoped, tag = 'input window, operand 0, single buffered']
    #allocation6 [shape = 's32[1]{0}', space=sflag, size = 0x4, scoped, tag = 'scoped memory for tpu_custom_call.1']
    #allocation7 [shape = 's32[1]{0}', space=sflag, size = 0x4, scoped, tag = 'scoped memory for tpu_custom_call.1']
    #allocation8 [shape = 's32[1]{0}', space=sflag, size = 0x4, scoped, tag = 'scoped memory for tpu_custom_call.1']
    #allocation9 [shape = 'u8[12288]{0}', space=vmem, size = 0x3000, scoped, tag = 'input window, operand 1, single buffered']
    #allocation10 [shape = 'u8[32768]{0}', space=vmem, size = 0x8000, scoped, tag = 'input window, operand 2, single buffered']
    #allocation11 [shape = 's32[1]{0}', space=sflag, size = 0x4, scoped, tag = 'scoped memory for tpu_custom_call.1']
    #allocation12 [shape = 'u8[4096]{0}', space=vmem, size = 0x1000, scoped, tag = 'output window, operand 0, single buffered']
    #allocation13 [shape = 'u8[4096]{0}', space=vmem, size = 0x1000, scoped, tag = 'output window, operand 1, single buffered']
    #allocation14 [shape = 's32[1]{0}', space=sflag, size = 0x4, scoped, tag = 'scoped memory for tpu_custom_call.1']
    #allocation15 [shape = 'u8[512]{0}', space=vmem, size = 0x400, scoped, tag = 'output window, operand 2, single buffered']
    #allocation16 [shape = 'u8[512]{0}', space=vmem, size = 0x400, scoped, tag = 'output window, operand 3, single buffered']
    #allocation17 [shape = 's32[1]{0}', space=sflag, size = 0x4, scoped, tag = 'scoped memory for tpu_custom_call.1']
    %19 = vsyncpa [#allocation8], 0
    %20 = vsyncpa [#allocation6], 0
    %21 = vsyncpa [#allocation11], 0
    %22 = vsyncpa [#allocation7], 0
    %23 = vsyncpa [#allocation14], 0
    %24 = vsyncpa [#allocation17], 0
    // Predicated region
    $region2: #{tpu_custom_call.1} parent=1 // pred_check
      _
    $region3: #{tpu_custom_call.1} parent=1 // pred_check_branch
      %26 = sbr.rel (0) target = $region5
    $region4: #{tpu_custom_call.1} parent=1 // pred_region
      %s28 = ssub.s32 16, 16
      %29 = vsyncadd [#allocation8], %s28
      %s31 = sshll.u32 %s0, 4
      %s32 = int_to_ptr.vmem [resolvable:$true] %s31
      %34 = dma.vmem_to_smem %s32, 16, [#allocation5], [#allocation8]
    $region5: #{tpu_custom_call.1} parent=1 // pred_fallthru
      _
    // Predicated region
    $region6: #{tpu_custom_call.1} parent=1 // pred_check
      _
    $region7: #{tpu_custom_call.1} parent=1 // pred_check_branch
      %36 = sbr.rel (0) target = $region9
    $region8: #{tpu_custom_call.1} parent=1 // pred_region
      %s38 = ssub.s32 384, 384
      %39 = vsyncadd [#allocation6], %s38
      %s40 = sshll.u32 [#allocation9], 4
      %s41 = int_to_ptr.vmem [resolvable:$true] %s40
      %46 = dma.hbm_to_vmem [thread:$0]  %s1, 384, %s41, [#allocation6], 128, 128, 8
    $region9: #{tpu_custom_call.1} parent=1 // pred_fallthru
      _
    // Predicated region
    $region10: #{tpu_custom_call.1} parent=1 // pred_check
      _
    $region11: #{tpu_custom_call.1} parent=1 // pred_check_branch
      %48 = sbr.rel (0) target = $region13
    $region12: #{tpu_custom_call.1} parent=1 // pred_region
      %s50 = ssub.s32 1024, 1024
      %51 = vsyncadd [#allocation11], %s50
      %s52 = sshll.u32 [#allocation10], 4
      %s53 = int_to_ptr.vmem [resolvable:$true] %s52
      %58 = dma.hbm_to_vmem [thread:$0]  %s2, 1024, %s53, [#allocation11], 128, 128, 8
    $region13: #{tpu_custom_call.1} parent=1 // pred_fallthru
      _
    // Predicated region
    $region14: #{tpu_custom_call.1} parent=1 // pred_check
      _
    $region15: #{tpu_custom_call.1} parent=1 // pred_check_branch
      %60 = sbr.rel (0) target = $region17
    $region16: #{tpu_custom_call.1} parent=1 // pred_region
      _
    $region17: #{tpu_custom_call.1} parent=1 // pred_fallthru
      _
    // Predicated region
    $region18: #{tpu_custom_call.1} parent=1 // pred_check
      _
    $region19: #{tpu_custom_call.1} parent=1 // pred_check_branch
      %62 = sbr.rel (0) target = $region21
    $region20: #{tpu_custom_call.1} parent=1 // pred_region
      _
    $region21: #{tpu_custom_call.1} parent=1 // pred_fallthru
      _
    // Predicated region
    $region22: #{tpu_custom_call.1} parent=1 // pred_check
      _
    $region23: #{tpu_custom_call.1} parent=1 // pred_check_branch
      %64 = sbr.rel (0) target = $region25
    $region24: #{tpu_custom_call.1} parent=1 // pred_region
      _
    $region25: #{tpu_custom_call.1} parent=1 // pred_fallthru
      _
    // Predicated region
    $region26: #{tpu_custom_call.1} parent=1 // pred_check
      _
    $region27: #{tpu_custom_call.1} parent=1 // pred_check_branch
      %66 = sbr.rel (0) target = $region29
    $region28: #{tpu_custom_call.1} parent=1 // pred_region
      _
    $region29: #{tpu_custom_call.1} parent=1 // pred_fallthru
      _
    // Predicated region
    $region30: #{tpu_custom_call.1} parent=1 // pred_check
      _
    $region31: #{tpu_custom_call.1} parent=1 // pred_check_branch
      %68 = sbr.rel (0) target = $region33
    $region32: #{tpu_custom_call.1} parent=1 // pred_region
      _
    $region33: #{tpu_custom_call.1} parent=1 // pred_fallthru
      _
    // Predicated region
    $region34: #{tpu_custom_call.1} parent=1 // pred_check
      _
    $region35: #{tpu_custom_call.1} parent=1 // pred_check_branch
      %70 = sbr.rel (0) target = $region37
    $region36: #{tpu_custom_call.1} parent=1 // pred_region
      _
    $region37: #{tpu_custom_call.1} parent=1 // pred_fallthru
      _
    // Predicated region
    $region38: #{tpu_custom_call.1} parent=1 // pred_check
      _
    $region39: #{tpu_custom_call.1} parent=1 // pred_check_branch
      %72 = sbr.rel (0) target = $region41
    $region40: #{tpu_custom_call.1} parent=1 // pred_region
      _
    $region41: #{tpu_custom_call.1} parent=1 // pred_fallthru
      _
    // Predicated region
    $region42: #{tpu_custom_call.1} parent=1 // pred_check
      _
    $region43: #{tpu_custom_call.1} parent=1 // pred_check_branch
      %74 = sbr.rel (0) target = $region45
    $region44: #{tpu_custom_call.1} parent=1 // pred_region
      %75 = dma.done [#allocation8], 16
    $region45: #{tpu_custom_call.1} parent=1 // pred_fallthru
      _
    // Predicated region
    $region46: #{tpu_custom_call.1} parent=1 // pred_check
      _
    $region47: #{tpu_custom_call.1} parent=1 // pred_check_branch
      %77 = sbr.rel (0) target = $region49
    $region48: #{tpu_custom_call.1} parent=1 // pred_region
      %78 = dma.done [#allocation6], 384
    $region49: #{tpu_custom_call.1} parent=1 // pred_fallthru
      _
    // Predicated region
    $region50: #{tpu_custom_call.1} parent=1 // pred_check
      _
    $region51: #{tpu_custom_call.1} parent=1 // pred_check_branch
      %80 = sbr.rel (0) target = $region53
    $region52: #{tpu_custom_call.1} parent=1 // pred_region
      %81 = dma.done [#allocation11], 1024
    $region53: #{tpu_custom_call.1} parent=1 // pred_fallthru
      _
    %82 = sfence
    %s83 = sld [smem:[#allocation5]]
    %s84 = scalar_lea.vmem [#allocation9], %s83
    %v85 = vld [vmem:[%s84] sm:$0x1]
    %vm86 = vcmask 253952
    %87 = vst.msk [vmem:[#allocation2] sm:$0x1] %vm86, %v85
    %89 = vrot.lane.b32.xlu0 %v85, 32
    %v90 = vpop.permute.xlu0 %89
    %vm92 = vcmask 516352
    %93 = vst.msk [vmem:[#allocation2 + $0x7] sm:$0x1] %vm92, %v90
    %s94 = sld [smem:[#allocation5 + $0x1]]
    %s95 = scalar_lea.vmem [#allocation9], %s94
    %v96 = vld [vmem:[%s95] sm:$0x1]
    %97 = vst.msk [vmem:[#allocation2 + $0x1] sm:$0x1] %vm86, %v96
    %99 = vrot.lane.b32.xlu0 %v96, 32
    %v100 = vpop.permute.xlu0 %99
    %102 = vst.msk [vmem:[#allocation2 + $0x6] sm:$0x1] %vm92, %v100
    %s103 = sld [smem:[#allocation5 + $0x2]]
    %s104 = scalar_lea.vmem [#allocation9], %s103
    %v105 = vld [vmem:[%s104] sm:$0x1]
    %106 = vst.msk [vmem:[#allocation2 + $0x2] sm:$0x1] %vm86, %v105
    %108 = vrot.lane.b32.xlu0 %v105, 32
    %v109 = vpop.permute.xlu0 %108
    %111 = vst.msk [vmem:[#allocation2 + $0x5] sm:$0x1] %vm92, %v109
    %s112 = sld [smem:[#allocation5 + $0x3]]
    %s113 = scalar_lea.vmem [#allocation9], %s112
    %v114 = vld [vmem:[%s113] sm:$0x1]
    %115 = vst.msk [vmem:[#allocation2 + $0x3] sm:$0x1] %vm86, %v114
    %117 = vrot.lane.b32.xlu0 %v114, 32
    %v118 = vpop.permute.xlu0 %117
    %120 = vst.msk [vmem:[#allocation2 + $0x4] sm:$0x1] %vm92, %v118
    %s121 = sld [smem:[#allocation5 + $0x4]]
    %s122 = scalar_lea.vmem [#allocation9], %s121
    %v123 = vld [vmem:[%s122] sm:$0x1]
    %124 = vst.msk [vmem:[#allocation2 + $0x4] sm:$0x1] %vm86, %v123
    %126 = vrot.lane.b32.xlu0 %v123, 32
    %v127 = vpop.permute.xlu0 %126
    %129 = vst.msk [vmem:[#allocation2 + $0x3] sm:$0x1] %vm92, %v127
    %s130 = sld [smem:[#allocation5 + $0x5]]
    %s131 = scalar_lea.vmem [#allocation9], %s130
    %v132 = vld [vmem:[%s131] sm:$0x1]
    %133 = vst.msk [vmem:[#allocation2 + $0x5] sm:$0x1] %vm86, %v132
    %135 = vrot.lane.b32.xlu0 %v132, 32
    %v136 = vpop.permute.xlu0 %135
    %138 = vst.msk [vmem:[#allocation2 + $0x2] sm:$0x1] %vm92, %v136
    %s139 = sld [smem:[#allocation5 + $0x6]]
    %s140 = scalar_lea.vmem [#allocation9], %s139
    %v141 = vld [vmem:[%s140] sm:$0x1]
    %142 = vst.msk [vmem:[#allocation2 + $0x6] sm:$0x1] %vm86, %v141
    %144 = vrot.lane.b32.xlu0 %v141, 32
    %v145 = vpop.permute.xlu0 %144
    %147 = vst.msk [vmem:[#allocation2 + $0x1] sm:$0x1] %vm92, %v145
    %s148 = sld [smem:[#allocation5 + $0x7]]
    %s149 = scalar_lea.vmem [#allocation9], %s148
    %v150 = vld [vmem:[%s149] sm:$0x1]
    %151 = vst.msk [vmem:[#allocation2 + $0x7] sm:$0x1] %vm86, %v150
    %153 = vrot.lane.b32.xlu0 %v150, 32
    %v154 = vpop.permute.xlu0 %153
    %156 = vst.msk [vmem:[#allocation2] sm:$0x1] %vm92, %v154
    %v157 = vld [vmem:[#allocation2] sm:$0xff]
    %v158 = vld [vmem:[#allocation10] sm:$0xff]
    %v159 = vld [vmem:[#allocation10 + $0x8] sm:$0xff]
    %v160 = vld [vmem:[#allocation10 + $0x10] sm:$0xff]
    %v161 = vld [vmem:[#allocation10 + $0x18] sm:$0xff]
    %v162 = vld [vmem:[#allocation10 + $0x20] sm:$0xff]
    %v163 = vld [vmem:[#allocation10 + $0x28] sm:$0xff]
    %v164 = vld [vmem:[#allocation10 + $0x30] sm:$0xff]
    %v165 = vld [vmem:[#allocation10 + $0x38] sm:$0xff]
    %v166 = vld [vmem:[%s3] sm:$0x1]
    %v168 = vlaneseq
    %v169 = vshrl.u32 %v168, 7
    %v170 = vsub.s32 0, %v169
    %v171 = vrot.slane %v166, %v170
    %vm173 = vcmask 523264
    %v175 = vsel %vm173, %v157, 0
    %177 = vmatprep.subr.mxu0 0.0
    %178 = vmatpush1.msra.mxu0 %v158
    %179 = vmatprep.subr.mxu0 0.0
    %180 = vmatpush1.msra.mxu0 %v159
    %181 = vmatprep.subr.mxu0 0.0
    %182 = vmatpush1.msra.mxu0 %v160
    %183 = vmatprep.subr.mxu0 0.0
    %184 = vmatpush1.msra.mxu0 %v161
    %185 = vmatprep.subr.mxu0 0.0
    %186 = vmatpush1.msra.mxu0 %v162
    %187 = vmatprep.subr.mxu0 0.0
    %188 = vmatpush1.msra.mxu0 %v163
    %189 = vmatprep.subr.mxu0 0.0
    %190 = vmatpush1.msra.mxu0 %v164
    %191 = vmatprep.subr.mxu0 0.0
    %192 = vmatpush1.msra.mxu0 %v165
    %193 = vmatprep.subr.mxu0 0.0
    %194 = vmatpush1.msra.mxu0 0.0
    %195 = vmatprep.subr.mxu0 0.0
    %196 = vmatpush1.msra.mxu0 0.0
    %197 = vmatprep.subr.mxu0 0.0
    %198 = vmatpush1.msra.mxu0 0.0
    %199 = vmatprep.subr.mxu0 0.0
    %200 = vmatpush1.msra.mxu0 0.0
    %201 = vmatprep.subr.mxu0 0.0
    %202 = vmatpush1.msra.mxu0 0.0
    %203 = vmatprep.subr.mxu0 0.0
    %204 = vmatpush1.msra.mxu0 0.0
    %205 = vmatprep.subr.mxu0 0.0
    %206 = vmatpush1.msra.mxu0 0.0
    %207 = vmatprep.subr.mxu0 0.0
    %208 = vmatpush1.msra.mxu0 0.0
    %209 = vmatprep.subr.mxu0 0.0
    %210 = vmatpush1.msra.mxu0 0.0
    %211 = vmatprep.subr.mxu0 0.0
    %212 = vmatpush1.msra.mxu0 0.0
    %213 = vmatprep.subr.mxu0 0.0
    %214 = vmatpush1.msra.mxu0 0.0
    %215 = vmatprep.subr.mxu0 0.0
    %216 = vmatpush1.msra.mxu0 0.0
    %217 = vmatprep.subr.mxu0 0.0
    %218 = vmatpush1.msra.mxu0 0.0
    %219 = vmatprep.subr.mxu0 0.0
    %220 = vmatpush1.msra.mxu0 0.0
    %221 = vmatprep.subr.mxu0 0.0
    %222 = vmatpush1.msra.mxu0 0.0
    %223 = vmatprep.subr.mxu0 0.0
    %224 = vmatpush1.msra.mxu0 0.0
    %225 = vmatprep.subr.mxu0 0.0
    %226 = vmatpush1.msra.mxu0 0.0
    %227 = vmatprep.subr.mxu0 0.0
    %228 = vmatpush1.msra.mxu0 0.0
    %229 = vmatprep.subr.mxu0 0.0
    %230 = vmatpush1.msra.mxu0 0.0
    %231 = vmatprep.subr.mxu0 0.0
    %232 = vmatpush1.msra.mxu0 0.0
    %233 = vmatprep.subr.mxu0 0.0
    %234 = vmatpush1.msra.mxu0 0.0
    %235 = vmatprep.subr.mxu0 0.0
    %236 = vmatpush1.msra.mxu0 0.0
    %237 = vmatprep.subr.mxu0 0.0
    %238 = vmatpush1.msra.mxu0 0.0
    %239 = vmatprep.subr.mxu0 0.0
    %240 = vmatpush1.msra.mxu0 0.0
    %241 = vmatprep.mubr.f32.mxu0 0.0
    %242 = vmatmul.mubr.f32.gmra.mrb[0].mxu0 %v175
    %v243 = vpop.f32.mrb[0].mxu0
    %v244 = vadd.f32 %v171, %v243
    %v245 = vpop.f32.mrb[0].mxu0
    %246 = vdwg.mxu0
    %v247 = vld [vmem:[%s4] sm:$0xff]
    %v248 = vld [vmem:[%s4 + $0x8] sm:$0xff]
    %v249 = vld [vmem:[%s4 + $0x10] sm:$0xff]
    %v250 = vld [vmem:[%s4 + $0x18] sm:$0xff]
    %v251 = vlaneseq
    %v252 = vand.u32 %v251, 127
    %vm253 = vcmp.ge.s32.totalorder %v252, 64
    %vm254 = vcmp.lt.s32.totalorder %v252, 96
    %vm255 = vmand %vm253, %vm254
    %v256 = vsel %vm255, 1.0, 0.5
    %v257 = vsel %vm255, 0.0, 0.5
    %v258 = vld [vmem:[%s5] sm:$0x1]
    %v259 = vld [vmem:[%s6] sm:$0x1]
    %vm260 = vcmask 261120
    %v262 = vsel %vm260, %v258, 0
    %264 = vmatprep.subr.mxu0 0.0
    %265 = vmatpush1.msra.mxu0 %v247
    %266 = vmatprep.subr.mxu0 0.0
    %267 = vmatpush1.msra.mxu0 %v248
    %268 = vmatprep.subr.mxu0 0.0
    %269 = vmatpush1.msra.mxu0 %v249
    %270 = vmatprep.subr.mxu0 0.0
    %271 = vmatpush1.msra.mxu0 %v250
    %272 = vmatprep.subr.mxu0 0.0
    %273 = vmatpush1.msra.mxu0 0.0
    %274 = vmatprep.subr.mxu0 0.0
    %275 = vmatpush1.msra.mxu0 0.0
    %276 = vmatprep.subr.mxu0 0.0
    %277 = vmatpush1.msra.mxu0 0.0
    %278 = vmatprep.subr.mxu0 0.0
    %279 = vmatpush1.msra.mxu0 0.0
    %280 = vmatprep.subr.mxu0 0.0
    %281 = vmatpush1.msra.mxu0 0.0
    %282 = vmatprep.subr.mxu0 0.0
    %283 = vmatpush1.msra.mxu0 0.0
    %284 = vmatprep.subr.mxu0 0.0
    %285 = vmatpush1.msra.mxu0 0.0
    %286 = vmatprep.subr.mxu0 0.0
    %287 = vmatpush1.msra.mxu0 0.0
    %288 = vmatprep.subr.mxu0 0.0
    %289 = vmatpush1.msra.mxu0 0.0
    %290 = vmatprep.subr.mxu0 0.0
    %291 = vmatpush1.msra.mxu0 0.0
    %292 = vmatprep.subr.mxu0 0.0
    %293 = vmatpush1.msra.mxu0 0.0
    %294 = vmatprep.subr.mxu0 0.0
    %295 = vmatpush1.msra.mxu0 0.0
    %296 = vmatprep.subr.mxu0 0.0
    %297 = vmatpush1.msra.mxu0 0.0
    %298 = vmatprep.subr.mxu0 0.0
    %299 = vmatpush1.msra.mxu0 0.0
    %300 = vmatprep.subr.mxu0 0.0
    %301 = vmatpush1.msra.mxu0 0.0
    %302 = vmatprep.subr.mxu0 0.0
    %303 = vmatpush1.msra.mxu0 0.0
    %304 = vmatprep.subr.mxu0 0.0
    %305 = vmatpush1.msra.mxu0 0.0
    %306 = vmatprep.subr.mxu0 0.0
    %307 = vmatpush1.msra.mxu0 0.0
    %308 = vmatprep.subr.mxu0 0.0
    %309 = vmatpush1.msra.mxu0 0.0
    %310 = vmatprep.subr.mxu0 0.0
    %311 = vmatpush1.msra.mxu0 0.0
    %312 = vmatprep.subr.mxu0 0.0
    %313 = vmatpush1.msra.mxu0 0.0
    %314 = vmatprep.subr.mxu0 0.0
    %315 = vmatpush1.msra.mxu0 0.0
    %316 = vmatprep.subr.mxu0 0.0
    %317 = vmatpush1.msra.mxu0 0.0
    %318 = vmatprep.subr.mxu0 0.0
    %319 = vmatpush1.msra.mxu0 0.0
    %320 = vmatprep.subr.mxu0 0.0
    %321 = vmatpush1.msra.mxu0 0.0
    %322 = vmatprep.subr.mxu0 0.0
    %323 = vmatpush1.msra.mxu0 0.0
    %324 = vmatprep.subr.mxu0 0.0
    %325 = vmatpush1.msra.mxu0 0.0
    %326 = vmatprep.subr.mxu0 0.0
    %327 = vmatpush1.msra.mxu0 0.0
    %328 = vmatprep.mubr.f32.mxu0 0.0
    %329 = vmatmul.mubr.f32.gmra.mrb[0].mxu0 %v262
    %v330 = vpop.f32.mrb[0].mxu0
    %v331 = vadd.f32 0.0, %v330
    %v332 = vpop.f32.mrb[0].mxu0
    %333 = vdwg.mxu0
    %v334 = vadd.f32 %v244, %v331
    %v335 = vmul.f32 %v334, %v256
    %v336 = vtanh.pop %v335
    %v337 = vmul.f32 %v336, %v256
    %v338 = vadd.f32 %v337, %v257
    %v340 = vlaneseq
    %v341 = vshrl.u32 %v340, 7
    %v342 = vsub.s32 0, %v341
    %v343 = vrot.slane %v259, %v342
    %344 = vrot.lane.b32.xlu0 %v343, 32
    %v345 = vpop.permute.xlu0 %344
    %v347 = vmul.f32 %v338, %v345
    %349 = vrot.lane.b32.xlu0 %v338, 64
    %v350 = vpop.permute.xlu0 %349
    %v352 = vmul.f32 %v338, %v350
    %354 = vrot.lane.b32.xlu0 %v352, 32
    %v355 = vpop.permute.xlu0 %354
    %v357 = vadd.f32 %v347, %v355
    %v358 = vtanh.pop %v357
    %360 = vrot.lane.b32.xlu0 %v358, 64
    %v361 = vpop.permute.xlu0 %360
    %v363 = vmul.f32 %v338, %v361
    %365 = vrot.lane.b32.xlu0 %v363, 32
    %v366 = vpop.permute.xlu0 %365
    %vm368 = vcmask 122880
    %369 = vst.msk [vmem:[#allocation3] sm:$0x1] %vm368, %v366
    %vm370 = vcmask 254080
    %371 = vst.msk [vmem:[#allocation3 + $0x7] sm:$0x1] %vm370, %v366
    %v372 = vsel %vm260, %v366, 0
    %374 = vmatprep.subr.mxu0 0.0
    %375 = vmatpush1.msra.mxu0 %v247
    %376 = vmatprep.subr.mxu0 0.0
    %377 = vmatpush1.msra.mxu0 %v248
    %378 = vmatprep.subr.mxu0 0.0
    %379 = vmatpush1.msra.mxu0 %v249
    %380 = vmatprep.subr.mxu0 0.0
    %381 = vmatpush1.msra.mxu0 %v250
    %382 = vmatprep.subr.mxu0 0.0
    %383 = vmatpush1.msra.mxu0 0.0
    %384 = vmatprep.subr.mxu0 0.0
    %385 = vmatpush1.msra.mxu0 0.0
    %386 = vmatprep.subr.mxu0 0.0
    %387 = vmatpush1.msra.mxu0 0.0
    %388 = vmatprep.subr.mxu0 0.0
    %389 = vmatpush1.msra.mxu0 0.0
    %390 = vmatprep.subr.mxu0 0.0
    %391 = vmatpush1.msra.mxu0 0.0
    %392 = vmatprep.subr.mxu0 0.0
    %393 = vmatpush1.msra.mxu0 0.0
    %394 = vmatprep.subr.mxu0 0.0
    %395 = vmatpush1.msra.mxu0 0.0
    %396 = vmatprep.subr.mxu0 0.0
    %397 = vmatpush1.msra.mxu0 0.0
    %398 = vmatprep.subr.mxu0 0.0
    %399 = vmatpush1.msra.mxu0 0.0
    %400 = vmatprep.subr.mxu0 0.0
    %401 = vmatpush1.msra.mxu0 0.0
    %402 = vmatprep.subr.mxu0 0.0
    %403 = vmatpush1.msra.mxu0 0.0
    %404 = vmatprep.subr.mxu0 0.0
    %405 = vmatpush1.msra.mxu0 0.0
    %406 = vmatprep.subr.mxu0 0.0
    %407 = vmatpush1.msra.mxu0 0.0
    %408 = vmatprep.subr.mxu0 0.0
    %409 = vmatpush1.msra.mxu0 0.0
    %410 = vmatprep.subr.mxu0 0.0
    %411 = vmatpush1.msra.mxu0 0.0
    %412 = vmatprep.subr.mxu0 0.0
    %413 = vmatpush1.msra.mxu0 0.0
    %414 = vmatprep.subr.mxu0 0.0
    %415 = vmatpush1.msra.mxu0 0.0
    %416 = vmatprep.subr.mxu0 0.0
    %417 = vmatpush1.msra.mxu0 0.0
    %418 = vmatprep.subr.mxu0 0.0
    %419 = vmatpush1.msra.mxu0 0.0
    %420 = vmatprep.subr.mxu0 0.0
    %421 = vmatpush1.msra.mxu0 0.0
    %422 = vmatprep.subr.mxu0 0.0
    %423 = vmatpush1.msra.mxu0 0.0
    %424 = vmatprep.subr.mxu0 0.0
    %425 = vmatpush1.msra.mxu0 0.0
    %426 = vmatprep.subr.mxu0 0.0
    %427 = vmatpush1.msra.mxu0 0.0
    %428 = vmatprep.subr.mxu0 0.0
    %429 = vmatpush1.msra.mxu0 0.0
    %430 = vmatprep.subr.mxu0 0.0
    %431 = vmatpush1.msra.mxu0 0.0
    %432 = vmatprep.subr.mxu0 0.0
    %433 = vmatpush1.msra.mxu0 0.0
    %434 = vmatprep.subr.mxu0 0.0
    %435 = vmatpush1.msra.mxu0 0.0
    %436 = vmatprep.subr.mxu0 0.0
    %437 = vmatpush1.msra.mxu0 0.0
    %438 = vmatprep.mubr.f32.mxu0 0.0
    %439 = vmatmul.mubr.f32.gmra.mrb[0].mxu0 %v372
    %v440 = vpop.f32.mrb[0].mxu0
    %v441 = vadd.f32 0.0, %v440
    %v442 = vpop.f32.mrb[0].mxu0
    %443 = vdwg.mxu0
    %v445 = vrot.slane %v441, 7
    %v447 = vadd.f32 %v244, %v445
    %v448 = vmul.f32 %v447, %v256
    %v449 = vtanh.pop %v448
    %v450 = vmul.f32 %v449, %v256
    %v451 = vadd.f32 %v450, %v257
    %v453 = vrot.slane %v357, 7
    %v455 = vmul.f32 %v451, %v453
    %457 = vrot.lane.b32.xlu0 %v451, 64
    %v458 = vpop.permute.xlu0 %457
    %v460 = vmul.f32 %v451, %v458
    %462 = vrot.lane.b32.xlu0 %v460, 32
    %v463 = vpop.permute.xlu0 %462
    %v465 = vadd.f32 %v455, %v463
    %v466 = vtanh.pop %v465
    %468 = vrot.lane.b32.xlu0 %v466, 64
    %v469 = vpop.permute.xlu0 %468
    %v471 = vmul.f32 %v451, %v469
    %473 = vrot.lane.b32.xlu0 %v471, 32
    %v474 = vpop.permute.xlu0 %473
    %vm476 = vcmask 123905
    %477 = vst.msk [vmem:[#allocation3] sm:$0x2] %vm476, %v474
    %vm478 = vcmask 255105
    %479 = vst.msk [vmem:[#allocation3 + $0x5] sm:$0x2] %vm478, %v474
    %v480 = vrot.slane %v471, 1
    %481 = vrot.lane.b32.xlu0 %v480, 32
    %v482 = vpop.permute.xlu0 %481
    %v483 = vsel %vm260, %v482, 0
    %485 = vmatprep.subr.mxu0 0.0
    %486 = vmatpush1.msra.mxu0 %v247
    %487 = vmatprep.subr.mxu0 0.0
    %488 = vmatpush1.msra.mxu0 %v248
    %489 = vmatprep.subr.mxu0 0.0
    %490 = vmatpush1.msra.mxu0 %v249
    %491 = vmatprep.subr.mxu0 0.0
    %492 = vmatpush1.msra.mxu0 %v250
    %493 = vmatprep.subr.mxu0 0.0
    %494 = vmatpush1.msra.mxu0 0.0
    %495 = vmatprep.subr.mxu0 0.0
    %496 = vmatpush1.msra.mxu0 0.0
    %497 = vmatprep.subr.mxu0 0.0
    %498 = vmatpush1.msra.mxu0 0.0
    %499 = vmatprep.subr.mxu0 0.0
    %500 = vmatpush1.msra.mxu0 0.0
    %501 = vmatprep.subr.mxu0 0.0
    %502 = vmatpush1.msra.mxu0 0.0
    %503 = vmatprep.subr.mxu0 0.0
    %504 = vmatpush1.msra.mxu0 0.0
    %505 = vmatprep.subr.mxu0 0.0
    %506 = vmatpush1.msra.mxu0 0.0
    %507 = vmatprep.subr.mxu0 0.0
    %508 = vmatpush1.msra.mxu0 0.0
    %509 = vmatprep.subr.mxu0 0.0
    %510 = vmatpush1.msra.mxu0 0.0
    %511 = vmatprep.subr.mxu0 0.0
    %512 = vmatpush1.msra.mxu0 0.0
    %513 = vmatprep.subr.mxu0 0.0
    %514 = vmatpush1.msra.mxu0 0.0
    %515 = vmatprep.subr.mxu0 0.0
    %516 = vmatpush1.msra.mxu0 0.0
    %517 = vmatprep.subr.mxu0 0.0
    %518 = vmatpush1.msra.mxu0 0.0
    %519 = vmatprep.subr.mxu0 0.0
    %520 = vmatpush1.msra.mxu0 0.0
    %521 = vmatprep.subr.mxu0 0.0
    %522 = vmatpush1.msra.mxu0 0.0
    %523 = vmatprep.subr.mxu0 0.0
    %524 = vmatpush1.msra.mxu0 0.0
    %525 = vmatprep.subr.mxu0 0.0
    %526 = vmatpush1.msra.mxu0 0.0
    %527 = vmatprep.subr.mxu0 0.0
    %528 = vmatpush1.msra.mxu0 0.0
    %529 = vmatprep.subr.mxu0 0.0
    %530 = vmatpush1.msra.mxu0 0.0
    %531 = vmatprep.subr.mxu0 0.0
    %532 = vmatpush1.msra.mxu0 0.0
    %533 = vmatprep.subr.mxu0 0.0
    %534 = vmatpush1.msra.mxu0 0.0
    %535 = vmatprep.subr.mxu0 0.0
    %536 = vmatpush1.msra.mxu0 0.0
    %537 = vmatprep.subr.mxu0 0.0
    %538 = vmatpush1.msra.mxu0 0.0
    %539 = vmatprep.subr.mxu0 0.0
    %540 = vmatpush1.msra.mxu0 0.0
    %541 = vmatprep.subr.mxu0 0.0
    %542 = vmatpush1.msra.mxu0 0.0
    %543 = vmatprep.subr.mxu0 0.0
    %544 = vmatpush1.msra.mxu0 0.0
    %545 = vmatprep.subr.mxu0 0.0
    %546 = vmatpush1.msra.mxu0 0.0
    %547 = vmatprep.subr.mxu0 0.0
    %548 = vmatpush1.msra.mxu0 0.0
    %549 = vmatprep.mubr.f32.mxu0 0.0
    %550 = vmatmul.mubr.f32.gmra.mrb[0].mxu0 %v483
    %v551 = vpop.f32.mrb[0].mxu0
    %v552 = vadd.f32 0.0, %v551
    %v553 = vpop.f32.mrb[0].mxu0
    %554 = vdwg.mxu0
    %v556 = vrot.slane %v552, 6
    %v558 = vadd.f32 %v244, %v556
    %v559 = vmul.f32 %v558, %v256
    %v560 = vtanh.pop %v559
    %v561 = vmul.f32 %v560, %v256
    %v562 = vadd.f32 %v561, %v257
    %v564 = vrot.slane %v465, 7
    %v566 = vmul.f32 %v562, %v564
    %568 = vrot.lane.b32.xlu0 %v562, 64
    %v569 = vpop.permute.xlu0 %568
    %v571 = vmul.f32 %v562, %v569
    %573 = vrot.lane.b32.xlu0 %v571, 32
    %v574 = vpop.permute.xlu0 %573
    %v576 = vadd.f32 %v566, %v574
    %v577 = vtanh.pop %v576
    %579 = vrot.lane.b32.xlu0 %v577, 64
    %v580 = vpop.permute.xlu0 %579
    %v582 = vmul.f32 %v562, %v580
    %584 = vrot.lane.b32.xlu0 %v582, 32
    %v585 = vpop.permute.xlu0 %584
    %vm587 = vcmask 124930
    %588 = vst.msk [vmem:[#allocation3] sm:$0x4] %vm587, %v585
    %vm589 = vcmask 256130
    %590 = vst.msk [vmem:[#allocation3 + $0x3] sm:$0x4] %vm589, %v585
    %v591 = vrot.slane %v582, 2
    %592 = vrot.lane.b32.xlu0 %v591, 32
    %v593 = vpop.permute.xlu0 %592
    %v594 = vsel %vm260, %v593, 0
    %596 = vmatprep.subr.mxu0 0.0
    %597 = vmatpush1.msra.mxu0 %v247
    %598 = vmatprep.subr.mxu0 0.0
    %599 = vmatpush1.msra.mxu0 %v248
    %600 = vmatprep.subr.mxu0 0.0
    %601 = vmatpush1.msra.mxu0 %v249
    %602 = vmatprep.subr.mxu0 0.0
    %603 = vmatpush1.msra.mxu0 %v250
    %604 = vmatprep.subr.mxu0 0.0
    %605 = vmatpush1.msra.mxu0 0.0
    %606 = vmatprep.subr.mxu0 0.0
    %607 = vmatpush1.msra.mxu0 0.0
    %608 = vmatprep.subr.mxu0 0.0
    %609 = vmatpush1.msra.mxu0 0.0
    %610 = vmatprep.subr.mxu0 0.0
    %611 = vmatpush1.msra.mxu0 0.0
    %612 = vmatprep.subr.mxu0 0.0
    %613 = vmatpush1.msra.mxu0 0.0
    %614 = vmatprep.subr.mxu0 0.0
    %615 = vmatpush1.msra.mxu0 0.0
    %616 = vmatprep.subr.mxu0 0.0
    %617 = vmatpush1.msra.mxu0 0.0
    %618 = vmatprep.subr.mxu0 0.0
    %619 = vmatpush1.msra.mxu0 0.0
    %620 = vmatprep.subr.mxu0 0.0
    %621 = vmatpush1.msra.mxu0 0.0
    %622 = vmatprep.subr.mxu0 0.0
    %623 = vmatpush1.msra.mxu0 0.0
    %624 = vmatprep.subr.mxu0 0.0
    %625 = vmatpush1.msra.mxu0 0.0
    %626 = vmatprep.subr.mxu0 0.0
    %627 = vmatpush1.msra.mxu0 0.0
    %628 = vmatprep.subr.mxu0 0.0
    %629 = vmatpush1.msra.mxu0 0.0
    %630 = vmatprep.subr.mxu0 0.0
    %631 = vmatpush1.msra.mxu0 0.0
    %632 = vmatprep.subr.mxu0 0.0
    %633 = vmatpush1.msra.mxu0 0.0
    %634 = vmatprep.subr.mxu0 0.0
    %635 = vmatpush1.msra.mxu0 0.0
    %636 = vmatprep.subr.mxu0 0.0
    %637 = vmatpush1.msra.mxu0 0.0
    %638 = vmatprep.subr.mxu0 0.0
    %639 = vmatpush1.msra.mxu0 0.0
    %640 = vmatprep.subr.mxu0 0.0
    %641 = vmatpush1.msra.mxu0 0.0
    %642 = vmatprep.subr.mxu0 0.0
    %643 = vmatpush1.msra.mxu0 0.0
    %644 = vmatprep.subr.mxu0 0.0
    %645 = vmatpush1.msra.mxu0 0.0
    %646 = vmatprep.subr.mxu0 0.0
    %647 = vmatpush1.msra.mxu0 0.0
    %648 = vmatprep.subr.mxu0 0.0
    %649 = vmatpush1.msra.mxu0 0.0
    %650 = vmatprep.subr.mxu0 0.0
    %651 = vmatpush1.msra.mxu0 0.0
    %652 = vmatprep.subr.mxu0 0.0
    %653 = vmatpush1.msra.mxu0 0.0
    %654 = vmatprep.subr.mxu0 0.0
    %655 = vmatpush1.msra.mxu0 0.0
    %656 = vmatprep.subr.mxu0 0.0
    %657 = vmatpush1.msra.mxu0 0.0
    %658 = vmatprep.subr.mxu0 0.0
    %659 = vmatpush1.msra.mxu0 0.0
    %660 = vmatprep.mubr.f32.mxu0 0.0
    %661 = vmatmul.mubr.f32.gmra.mrb[0].mxu0 %v594
    %v662 = vpop.f32.mrb[0].mxu0
    %v663 = vadd.f32 0.0, %v662
    %v664 = vpop.f32.mrb[0].mxu0
    %665 = vdwg.mxu0
    %v667 = vrot.slane %v663, 5
    %v669 = vadd.f32 %v244, %v667
    %v670 = vmul.f32 %v669, %v256
    %v671 = vtanh.pop %v670
    %v672 = vmul.f32 %v671, %v256
    %v673 = vadd.f32 %v672, %v257
    %v675 = vrot.slane %v576, 7
    %v677 = vmul.f32 %v673, %v675
    %679 = vrot.lane.b32.xlu0 %v673, 64
    %v680 = vpop.permute.xlu0 %679
    %v682 = vmul.f32 %v673, %v680
    %684 = vrot.lane.b32.xlu0 %v682, 32
    %v685 = vpop.permute.xlu0 %684
    %v687 = vadd.f32 %v677, %v685
    %v688 = vtanh.pop %v687
    %690 = vrot.lane.b32.xlu0 %v688, 64
    %v691 = vpop.permute.xlu0 %690
    %v693 = vmul.f32 %v673, %v691
    %695 = vrot.lane.b32.xlu0 %v693, 32
    %v696 = vpop.permute.xlu0 %695
    %vm698 = vcmask 125955
    %699 = vst.msk [vmem:[#allocation3] sm:$0x8] %vm698, %v696
    %vm700 = vcmask 257155
    %701 = vst.msk [vmem:[#allocation3 + $0x1] sm:$0x8] %vm700, %v696
    %v702 = vrot.slane %v693, 3
    %703 = vrot.lane.b32.xlu0 %v702, 32
    %v704 = vpop.permute.xlu0 %703
    %v705 = vsel %vm260, %v704, 0
    %707 = vmatprep.subr.mxu0 0.0
    %708 = vmatpush1.msra.mxu0 %v247
    %709 = vmatprep.subr.mxu0 0.0
    %710 = vmatpush1.msra.mxu0 %v248
    %711 = vmatprep.subr.mxu0 0.0
    %712 = vmatpush1.msra.mxu0 %v249
    %713 = vmatprep.subr.mxu0 0.0
    %714 = vmatpush1.msra.mxu0 %v250
    %715 = vmatprep.subr.mxu0 0.0
    %716 = vmatpush1.msra.mxu0 0.0
    %717 = vmatprep.subr.mxu0 0.0
    %718 = vmatpush1.msra.mxu0 0.0
    %719 = vmatprep.subr.mxu0 0.0
    %720 = vmatpush1.msra.mxu0 0.0
    %721 = vmatprep.subr.mxu0 0.0
    %722 = vmatpush1.msra.mxu0 0.0
    %723 = vmatprep.subr.mxu0 0.0
    %724 = vmatpush1.msra.mxu0 0.0
    %725 = vmatprep.subr.mxu0 0.0
    %726 = vmatpush1.msra.mxu0 0.0
    %727 = vmatprep.subr.mxu0 0.0
    %728 = vmatpush1.msra.mxu0 0.0
    %729 = vmatprep.subr.mxu0 0.0
    %730 = vmatpush1.msra.mxu0 0.0
    %731 = vmatprep.subr.mxu0 0.0
    %732 = vmatpush1.msra.mxu0 0.0
    %733 = vmatprep.subr.mxu0 0.0
    %734 = vmatpush1.msra.mxu0 0.0
    %735 = vmatprep.subr.mxu0 0.0
    %736 = vmatpush1.msra.mxu0 0.0
    %737 = vmatprep.subr.mxu0 0.0
    %738 = vmatpush1.msra.mxu0 0.0
    %739 = vmatprep.subr.mxu0 0.0
    %740 = vmatpush1.msra.mxu0 0.0
    %741 = vmatprep.subr.mxu0 0.0
    %742 = vmatpush1.msra.mxu0 0.0
    %743 = vmatprep.subr.mxu0 0.0
    %744 = vmatpush1.msra.mxu0 0.0
    %745 = vmatprep.subr.mxu0 0.0
    %746 = vmatpush1.msra.mxu0 0.0
    %747 = vmatprep.subr.mxu0 0.0
    %748 = vmatpush1.msra.mxu0 0.0
    %749 = vmatprep.subr.mxu0 0.0
    %750 = vmatpush1.msra.mxu0 0.0
    %751 = vmatprep.subr.mxu0 0.0
    %752 = vmatpush1.msra.mxu0 0.0
    %753 = vmatprep.subr.mxu0 0.0
    %754 = vmatpush1.msra.mxu0 0.0
    %755 = vmatprep.subr.mxu0 0.0
    %756 = vmatpush1.msra.mxu0 0.0
    %757 = vmatprep.subr.mxu0 0.0
    %758 = vmatpush1.msra.mxu0 0.0
    %759 = vmatprep.subr.mxu0 0.0
    %760 = vmatpush1.msra.mxu0 0.0
    %761 = vmatprep.subr.mxu0 0.0
    %762 = vmatpush1.msra.mxu0 0.0
    %763 = vmatprep.subr.mxu0 0.0
    %764 = vmatpush1.msra.mxu0 0.0
    %765 = vmatprep.subr.mxu0 0.0
    %766 = vmatpush1.msra.mxu0 0.0
    %767 = vmatprep.subr.mxu0 0.0
    %768 = vmatpush1.msra.mxu0 0.0
    %769 = vmatprep.subr.mxu0 0.0
    %770 = vmatpush1.msra.mxu0 0.0
    %771 = vmatprep.mubr.f32.mxu0 0.0
    %772 = vmatmul.mubr.f32.gmra.mrb[0].mxu0 %v705
    %v773 = vpop.f32.mrb[0].mxu0
    %v774 = vadd.f32 0.0, %v773
    %v775 = vpop.f32.mrb[0].mxu0
    %776 = vdwg.mxu0
    %v778 = vrot.slane %v774, 4
    %v780 = vadd.f32 %v244, %v778
    %v781 = vmul.f32 %v780, %v256
    %v782 = vtanh.pop %v781
    %v783 = vmul.f32 %v782, %v256
    %v784 = vadd.f32 %v783, %v257
    %v786 = vrot.slane %v687, 7
    %v788 = vmul.f32 %v784, %v786
    %790 = vrot.lane.b32.xlu0 %v784, 64
    %v791 = vpop.permute.xlu0 %790
    %v793 = vmul.f32 %v784, %v791
    %795 = vrot.lane.b32.xlu0 %v793, 32
    %v796 = vpop.permute.xlu0 %795
    %v798 = vadd.f32 %v788, %v796
    %v799 = vtanh.pop %v798
    %801 = vrot.lane.b32.xlu0 %v799, 64
    %v802 = vpop.permute.xlu0 %801
    %v804 = vmul.f32 %v784, %v802
    %806 = vrot.lane.b32.xlu0 %v804, 32
    %v807 = vpop.permute.xlu0 %806
    %vm809 = vcmask 126980
    %810 = vst.msk [vmem:[#allocation3] sm:$0x10] %vm809, %v807
    %vm811 = vcmask 258180
    %812 = vst.msk [vmem:[#allocation3 - $0x1] sm:$0x10] %vm811, %v807
    %v813 = vrot.slane %v804, 4
    %814 = vrot.lane.b32.xlu0 %v813, 32
    %v815 = vpop.permute.xlu0 %814
    %v816 = vsel %vm260, %v815, 0
    %818 = vmatprep.subr.mxu0 0.0
    %819 = vmatpush1.msra.mxu0 %v247
    %820 = vmatprep.subr.mxu0 0.0
    %821 = vmatpush1.msra.mxu0 %v248
    %822 = vmatprep.subr.mxu0 0.0
    %823 = vmatpush1.msra.mxu0 %v249
    %824 = vmatprep.subr.mxu0 0.0
    %825 = vmatpush1.msra.mxu0 %v250
    %826 = vmatprep.subr.mxu0 0.0
    %827 = vmatpush1.msra.mxu0 0.0
    %828 = vmatprep.subr.mxu0 0.0
    %829 = vmatpush1.msra.mxu0 0.0
    %830 = vmatprep.subr.mxu0 0.0
    %831 = vmatpush1.msra.mxu0 0.0
    %832 = vmatprep.subr.mxu0 0.0
    %833 = vmatpush1.msra.mxu0 0.0
    %834 = vmatprep.subr.mxu0 0.0
    %835 = vmatpush1.msra.mxu0 0.0
    %836 = vmatprep.subr.mxu0 0.0
    %837 = vmatpush1.msra.mxu0 0.0
    %838 = vmatprep.subr.mxu0 0.0
    %839 = vmatpush1.msra.mxu0 0.0
    %840 = vmatprep.subr.mxu0 0.0
    %841 = vmatpush1.msra.mxu0 0.0
    %842 = vmatprep.subr.mxu0 0.0
    %843 = vmatpush1.msra.mxu0 0.0
    %844 = vmatprep.subr.mxu0 0.0
    %845 = vmatpush1.msra.mxu0 0.0
    %846 = vmatprep.subr.mxu0 0.0
    %847 = vmatpush1.msra.mxu0 0.0
    %848 = vmatprep.subr.mxu0 0.0
    %849 = vmatpush1.msra.mxu0 0.0
    %850 = vmatprep.subr.mxu0 0.0
    %851 = vmatpush1.msra.mxu0 0.0
    %852 = vmatprep.subr.mxu0 0.0
    %853 = vmatpush1.msra.mxu0 0.0
    %854 = vmatprep.subr.mxu0 0.0
    %855 = vmatpush1.msra.mxu0 0.0
    %856 = vmatprep.subr.mxu0 0.0
    %857 = vmatpush1.msra.mxu0 0.0
    %858 = vmatprep.subr.mxu0 0.0
    %859 = vmatpush1.msra.mxu0 0.0
    %860 = vmatprep.subr.mxu0 0.0
    %861 = vmatpush1.msra.mxu0 0.0
    %862 = vmatprep.subr.mxu0 0.0
    %863 = vmatpush1.msra.mxu0 0.0
    %864 = vmatprep.subr.mxu0 0.0
    %865 = vmatpush1.msra.mxu0 0.0
    %866 = vmatprep.subr.mxu0 0.0
    %867 = vmatpush1.msra.mxu0 0.0
    %868 = vmatprep.subr.mxu0 0.0
    %869 = vmatpush1.msra.mxu0 0.0
    %870 = vmatprep.subr.mxu0 0.0
    %871 = vmatpush1.msra.mxu0 0.0
    %872 = vmatprep.subr.mxu0 0.0
    %873 = vmatpush1.msra.mxu0 0.0
    %874 = vmatprep.subr.mxu0 0.0
    %875 = vmatpush1.msra.mxu0 0.0
    %876 = vmatprep.subr.mxu0 0.0
    %877 = vmatpush1.msra.mxu0 0.0
    %878 = vmatprep.subr.mxu0 0.0
    %879 = vmatpush1.msra.mxu0 0.0
    %880 = vmatprep.subr.mxu0 0.0
    %881 = vmatpush1.msra.mxu0 0.0
    %882 = vmatprep.mubr.f32.mxu0 0.0
    %883 = vmatmul.mubr.f32.gmra.mrb[0].mxu0 %v816
    %v884 = vpop.f32.mrb[0].mxu0
    %v885 = vadd.f32 0.0, %v884
    %v886 = vpop.f32.mrb[0].mxu0
    %887 = vdwg.mxu0
    %v889 = vrot.slane %v885, 3
    %v891 = vadd.f32 %v244, %v889
    %v892 = vmul.f32 %v891, %v256
    %v893 = vtanh.pop %v892
    %v894 = vmul.f32 %v893, %v256
    %v895 = vadd.f32 %v894, %v257
    %v897 = vrot.slane %v798, 7
    %v899 = vmul.f32 %v895, %v897
    %901 = vrot.lane.b32.xlu0 %v895, 64
    %v902 = vpop.permute.xlu0 %901
    %v904 = vmul.f32 %v895, %v902
    %906 = vrot.lane.b32.xlu0 %v904, 32
    %v907 = vpop.permute.xlu0 %906
    %v909 = vadd.f32 %v899, %v907
    %v910 = vtanh.pop %v909
    %912 = vrot.lane.b32.xlu0 %v910, 64
    %v913 = vpop.permute.xlu0 %912
    %v915 = vmul.f32 %v895, %v913
    %917 = vrot.lane.b32.xlu0 %v915, 32
    %v918 = vpop.permute.xlu0 %917
    %vm920 = vcmask 128005
    %921 = vst.msk [vmem:[#allocation3] sm:$0x20] %vm920, %v918
    %vm922 = vcmask 259205
    %923 = vst.msk [vmem:[#allocation3 - $0x3] sm:$0x20] %vm922, %v918
    %v924 = vrot.slane %v915, 5
    %925 = vrot.lane.b32.xlu0 %v924, 32
    %v926 = vpop.permute.xlu0 %925
    %v927 = vsel %vm260, %v926, 0
    %929 = vmatprep.subr.mxu0 0.0
    %930 = vmatpush1.msra.mxu0 %v247
    %931 = vmatprep.subr.mxu0 0.0
    %932 = vmatpush1.msra.mxu0 %v248
    %933 = vmatprep.subr.mxu0 0.0
    %934 = vmatpush1.msra.mxu0 %v249
    %935 = vmatprep.subr.mxu0 0.0
    %936 = vmatpush1.msra.mxu0 %v250
    %937 = vmatprep.subr.mxu0 0.0
    %938 = vmatpush1.msra.mxu0 0.0
    %939 = vmatprep.subr.mxu0 0.0
    %940 = vmatpush1.msra.mxu0 0.0
    %941 = vmatprep.subr.mxu0 0.0
    %942 = vmatpush1.msra.mxu0 0.0
    %943 = vmatprep.subr.mxu0 0.0
    %944 = vmatpush1.msra.mxu0 0.0
    %945 = vmatprep.subr.mxu0 0.0
    %946 = vmatpush1.msra.mxu0 0.0
    %947 = vmatprep.subr.mxu0 0.0
    %948 = vmatpush1.msra.mxu0 0.0
    %949 = vmatprep.subr.mxu0 0.0
    %950 = vmatpush1.msra.mxu0 0.0
    %951 = vmatprep.subr.mxu0 0.0
    %952 = vmatpush1.msra.mxu0 0.0
    %953 = vmatprep.subr.mxu0 0.0
    %954 = vmatpush1.msra.mxu0 0.0
    %955 = vmatprep.subr.mxu0 0.0
    %956 = vmatpush1.msra.mxu0 0.0
    %957 = vmatprep.subr.mxu0 0.0
    %958 = vmatpush1.msra.mxu0 0.0
    %959 = vmatprep.subr.mxu0 0.0
    %960 = vmatpush1.msra.mxu0 0.0
    %961 = vmatprep.subr.mxu0 0.0
    %962 = vmatpush1.msra.mxu0 0.0
    %963 = vmatprep.subr.mxu0 0.0
    %964 = vmatpush1.msra.mxu0 0.0
    %965 = vmatprep.subr.mxu0 0.0
    %966 = vmatpush1.msra.mxu0 0.0
    %967 = vmatprep.subr.mxu0 0.0
    %968 = vmatpush1.msra.mxu0 0.0
    %969 = vmatprep.subr.mxu0 0.0
    %970 = vmatpush1.msra.mxu0 0.0
    %971 = vmatprep.subr.mxu0 0.0
    %972 = vmatpush1.msra.mxu0 0.0
    %973 = vmatprep.subr.mxu0 0.0
    %974 = vmatpush1.msra.mxu0 0.0
    %975 = vmatprep.subr.mxu0 0.0
    %976 = vmatpush1.msra.mxu0 0.0
    %977 = vmatprep.subr.mxu0 0.0
    %978 = vmatpush1.msra.mxu0 0.0
    %979 = vmatprep.subr.mxu0 0.0
    %980 = vmatpush1.msra.mxu0 0.0
    %981 = vmatprep.subr.mxu0 0.0
    %982 = vmatpush1.msra.mxu0 0.0
    %983 = vmatprep.subr.mxu0 0.0
    %984 = vmatpush1.msra.mxu0 0.0
    %985 = vmatprep.subr.mxu0 0.0
    %986 = vmatpush1.msra.mxu0 0.0
    %987 = vmatprep.subr.mxu0 0.0
    %988 = vmatpush1.msra.mxu0 0.0
    %989 = vmatprep.subr.mxu0 0.0
    %990 = vmatpush1.msra.mxu0 0.0
    %991 = vmatprep.subr.mxu0 0.0
    %992 = vmatpush1.msra.mxu0 0.0
    %993 = vmatprep.mubr.f32.mxu0 0.0
    %994 = vmatmul.mubr.f32.gmra.mrb[0].mxu0 %v927
    %v995 = vpop.f32.mrb[0].mxu0
    %v996 = vadd.f32 0.0, %v995
    %v997 = vpop.f32.mrb[0].mxu0
    %998 = vdwg.mxu0
    %v1000 = vrot.slane %v996, 2
    %v1002 = vadd.f32 %v244, %v1000
    %v1003 = vmul.f32 %v1002, %v256
    %v1004 = vtanh.pop %v1003
    %v1005 = vmul.f32 %v1004, %v256
    %v1006 = vadd.f32 %v1005, %v257
    %v1008 = vrot.slane %v909, 7
    %v1010 = vmul.f32 %v1006, %v1008
    %1012 = vrot.lane.b32.xlu0 %v1006, 64
    %v1013 = vpop.permute.xlu0 %1012
    %v1015 = vmul.f32 %v1006, %v1013
    %1017 = vrot.lane.b32.xlu0 %v1015, 32
    %v1018 = vpop.permute.xlu0 %1017
    %v1020 = vadd.f32 %v1010, %v1018
    %v1021 = vtanh.pop %v1020
    %1023 = vrot.lane.b32.xlu0 %v1021, 64
    %v1024 = vpop.permute.xlu0 %1023
    %v1026 = vmul.f32 %v1006, %v1024
    %1028 = vrot.lane.b32.xlu0 %v1026, 32
    %v1029 = vpop.permute.xlu0 %1028
    %vm1031 = vcmask 129030
    %1032 = vst.msk [vmem:[#allocation3] sm:$0x40] %vm1031, %v1029
    %vm1033 = vcmask 260230
    %1034 = vst.msk [vmem:[#allocation3 - $0x5] sm:$0x40] %vm1033, %v1029
    %v1035 = vrot.slane %v1026, 6
    %1036 = vrot.lane.b32.xlu0 %v1035, 32
    %v1037 = vpop.permute.xlu0 %1036
    %v1038 = vsel %vm260, %v1037, 0
    %1040 = vmatprep.subr.mxu0 0.0
    %1041 = vmatpush1.msra.mxu0 %v247
    %1042 = vmatprep.subr.mxu0 0.0
    %1043 = vmatpush1.msra.mxu0 %v248
    %1044 = vmatprep.subr.mxu0 0.0
    %1045 = vmatpush1.msra.mxu0 %v249
    %1046 = vmatprep.subr.mxu0 0.0
    %1047 = vmatpush1.msra.mxu0 %v250
    %1048 = vmatprep.subr.mxu0 0.0
    %1049 = vmatpush1.msra.mxu0 0.0
    %1050 = vmatprep.subr.mxu0 0.0
    %1051 = vmatpush1.msra.mxu0 0.0
    %1052 = vmatprep.subr.mxu0 0.0
    %1053 = vmatpush1.msra.mxu0 0.0
    %1054 = vmatprep.subr.mxu0 0.0
    %1055 = vmatpush1.msra.mxu0 0.0
    %1056 = vmatprep.subr.mxu0 0.0
    %1057 = vmatpush1.msra.mxu0 0.0
    %1058 = vmatprep.subr.mxu0 0.0
    %1059 = vmatpush1.msra.mxu0 0.0
    %1060 = vmatprep.subr.mxu0 0.0
    %1061 = vmatpush1.msra.mxu0 0.0
    %1062 = vmatprep.subr.mxu0 0.0
    %1063 = vmatpush1.msra.mxu0 0.0
    %1064 = vmatprep.subr.mxu0 0.0
    %1065 = vmatpush1.msra.mxu0 0.0
    %1066 = vmatprep.subr.mxu0 0.0
    %1067 = vmatpush1.msra.mxu0 0.0
    %1068 = vmatprep.subr.mxu0 0.0
    %1069 = vmatpush1.msra.mxu0 0.0
    %1070 = vmatprep.subr.mxu0 0.0
    %1071 = vmatpush1.msra.mxu0 0.0
    %1072 = vmatprep.subr.mxu0 0.0
    %1073 = vmatpush1.msra.mxu0 0.0
    %1074 = vmatprep.subr.mxu0 0.0
    %1075 = vmatpush1.msra.mxu0 0.0
    %1076 = vmatprep.subr.mxu0 0.0
    %1077 = vmatpush1.msra.mxu0 0.0
    %1078 = vmatprep.subr.mxu0 0.0
    %1079 = vmatpush1.msra.mxu0 0.0
    %1080 = vmatprep.subr.mxu0 0.0
    %1081 = vmatpush1.msra.mxu0 0.0
    %1082 = vmatprep.subr.mxu0 0.0
    %1083 = vmatpush1.msra.mxu0 0.0
    %1084 = vmatprep.subr.mxu0 0.0
    %1085 = vmatpush1.msra.mxu0 0.0
    %1086 = vmatprep.subr.mxu0 0.0
    %1087 = vmatpush1.msra.mxu0 0.0
    %1088 = vmatprep.subr.mxu0 0.0
    %1089 = vmatpush1.msra.mxu0 0.0
    %1090 = vmatprep.subr.mxu0 0.0
    %1091 = vmatpush1.msra.mxu0 0.0
    %1092 = vmatprep.subr.mxu0 0.0
    %1093 = vmatpush1.msra.mxu0 0.0
    %1094 = vmatprep.subr.mxu0 0.0
    %1095 = vmatpush1.msra.mxu0 0.0
    %1096 = vmatprep.subr.mxu0 0.0
    %1097 = vmatpush1.msra.mxu0 0.0
    %1098 = vmatprep.subr.mxu0 0.0
    %1099 = vmatpush1.msra.mxu0 0.0
    %1100 = vmatprep.subr.mxu0 0.0
    %1101 = vmatpush1.msra.mxu0 0.0
    %1102 = vmatprep.subr.mxu0 0.0
    %1103 = vmatpush1.msra.mxu0 0.0
    %1104 = vmatprep.mubr.f32.mxu0 0.0
    %1105 = vmatmul.mubr.f32.gmra.mrb[0].mxu0 %v1038
    %v1106 = vpop.f32.mrb[0].mxu0
    %v1107 = vadd.f32 0.0, %v1106
    %v1108 = vpop.f32.mrb[0].mxu0
    %1109 = vdwg.mxu0
    %v1111 = vrot.slane %v1107, 1
    %v1113 = vadd.f32 %v244, %v1111
    %v1114 = vmul.f32 %v1113, %v256
    %v1115 = vtanh.pop %v1114
    %v1116 = vmul.f32 %v1115, %v256
    %v1117 = vadd.f32 %v1116, %v257
    %v1119 = vrot.slane %v1020, 7
    %v1121 = vmul.f32 %v1117, %v1119
    %1123 = vrot.lane.b32.xlu0 %v1117, 64
    %v1124 = vpop.permute.xlu0 %1123
    %v1126 = vmul.f32 %v1117, %v1124
    %1128 = vrot.lane.b32.xlu0 %v1126, 32
    %v1129 = vpop.permute.xlu0 %1128
    %v1131 = vadd.f32 %v1121, %v1129
    %v1132 = vtanh.pop %v1131
    %1134 = vrot.lane.b32.xlu0 %v1132, 64
    %v1135 = vpop.permute.xlu0 %1134
    %v1137 = vmul.f32 %v1117, %v1135
    %1139 = vrot.lane.b32.xlu0 %v1137, 32
    %v1140 = vpop.permute.xlu0 %1139
    %vm1142 = vcmask 130055
    %1143 = vst.msk [vmem:[#allocation3] sm:$0x80] %vm1142, %v1140
    %vm1144 = vcmask 261255
    %1145 = vst.msk [vmem:[#allocation3 - $0x7] sm:$0x80] %vm1144, %v1140
    %v1146 = vld [vmem:[#allocation3] sm:$0xff]
    %v1147 = vld [vmem:[%s7] sm:$0xff]
    %v1148 = vld [vmem:[%s7 + $0x8] sm:$0xff]
    %v1149 = vld [vmem:[%s7 + $0x10] sm:$0xff]
    %v1150 = vld [vmem:[%s7 + $0x18] sm:$0xff]
    %v1151 = vld [vmem:[%s8] sm:$0x1]
    %v1153 = vlaneseq
    %v1154 = vshrl.u32 %v1153, 7
    %v1155 = vsub.s32 0, %v1154
    %v1156 = vrot.slane %v1151, %v1155
    %v1159 = vsel %vm260, %v1146, 0
    %1161 = vmatprep.subr.mxu0 0.0
    %1162 = vmatpush1.msra.mxu0 %v1147
    %1163 = vmatprep.subr.mxu0 0.0
    %1164 = vmatpush1.msra.mxu0 %v1148
    %1165 = vmatprep.subr.mxu0 0.0
    %1166 = vmatpush1.msra.mxu0 %v1149
    %1167 = vmatprep.subr.mxu0 0.0
    %1168 = vmatpush1.msra.mxu0 %v1150
    %1169 = vmatprep.subr.mxu0 0.0
    %1170 = vmatpush1.msra.mxu0 0.0
    %1171 = vmatprep.subr.mxu0 0.0
    %1172 = vmatpush1.msra.mxu0 0.0
    %1173 = vmatprep.subr.mxu0 0.0
    %1174 = vmatpush1.msra.mxu0 0.0
    %1175 = vmatprep.subr.mxu0 0.0
    %1176 = vmatpush1.msra.mxu0 0.0
    %1177 = vmatprep.subr.mxu0 0.0
    %1178 = vmatpush1.msra.mxu0 0.0
    %1179 = vmatprep.subr.mxu0 0.0
    %1180 = vmatpush1.msra.mxu0 0.0
    %1181 = vmatprep.subr.mxu0 0.0
    %1182 = vmatpush1.msra.mxu0 0.0
    %1183 = vmatprep.subr.mxu0 0.0
    %1184 = vmatpush1.msra.mxu0 0.0
    %1185 = vmatprep.subr.mxu0 0.0
    %1186 = vmatpush1.msra.mxu0 0.0
    %1187 = vmatprep.subr.mxu0 0.0
    %1188 = vmatpush1.msra.mxu0 0.0
    %1189 = vmatprep.subr.mxu0 0.0
    %1190 = vmatpush1.msra.mxu0 0.0
    %1191 = vmatprep.subr.mxu0 0.0
    %1192 = vmatpush1.msra.mxu0 0.0
    %1193 = vmatprep.subr.mxu0 0.0
    %1194 = vmatpush1.msra.mxu0 0.0
    %1195 = vmatprep.subr.mxu0 0.0
    %1196 = vmatpush1.msra.mxu0 0.0
    %1197 = vmatprep.subr.mxu0 0.0
    %1198 = vmatpush1.msra.mxu0 0.0
    %1199 = vmatprep.subr.mxu0 0.0
    %1200 = vmatpush1.msra.mxu0 0.0
    %1201 = vmatprep.subr.mxu0 0.0
    %1202 = vmatpush1.msra.mxu0 0.0
    %1203 = vmatprep.subr.mxu0 0.0
    %1204 = vmatpush1.msra.mxu0 0.0
    %1205 = vmatprep.subr.mxu0 0.0
    %1206 = vmatpush1.msra.mxu0 0.0
    %1207 = vmatprep.subr.mxu0 0.0
    %1208 = vmatpush1.msra.mxu0 0.0
    %1209 = vmatprep.subr.mxu0 0.0
    %1210 = vmatpush1.msra.mxu0 0.0
    %1211 = vmatprep.subr.mxu0 0.0
    %1212 = vmatpush1.msra.mxu0 0.0
    %1213 = vmatprep.subr.mxu0 0.0
    %1214 = vmatpush1.msra.mxu0 0.0
    %1215 = vmatprep.subr.mxu0 0.0
    %1216 = vmatpush1.msra.mxu0 0.0
    %1217 = vmatprep.subr.mxu0 0.0
    %1218 = vmatpush1.msra.mxu0 0.0
    %1219 = vmatprep.subr.mxu0 0.0
    %1220 = vmatpush1.msra.mxu0 0.0
    %1221 = vmatprep.subr.mxu0 0.0
    %1222 = vmatpush1.msra.mxu0 0.0
    %1223 = vmatprep.subr.mxu0 0.0
    %1224 = vmatpush1.msra.mxu0 0.0
    %1225 = vmatprep.mubr.f32.mxu0 0.0
    %1226 = vmatmul.mubr.f32.gmra.mrb[0].mxu0 %v1159
    %v1227 = vpop.f32.mrb[0].mxu0
    %v1228 = vadd.f32 %v1156, %v1227
    %v1229 = vpop.f32.mrb[0].mxu0
    %1230 = vdwg.mxu0
    %vm1231 = vcmask 64512
    %1232 = vst.msk [vmem:[#allocation12] sm:$0xff] %vm1231, %v1228
    %v1233 = vld [vmem:[%s9] sm:$0xff]
    %v1234 = vlaneseq
    %v1235 = vshrl.u32 %v1234, 7
    %vm1236 = vcmp.eq.s32.totalorder %v1235, %v252
    %v1237 = vsel %vm1236, 1, 0
    %v1238 = vcvt.s32.f32 %v1237
    %vm1239 = vcmp.eq.s32.totalorder %v1235, 3
    %v1240 = vsel %vm1239, 0.0, -10000.0
    %v1241 = vadd.f32 %v1240, %v1233
    %v1242 = vsel %vm1231, %v1241, -inf
    %v1243 = vrot.slane %v1242, 4
    %v1244 = vmax.f32 %v1242, %v1243
    %v1245 = vrot.slane %v1244, 2
    %v1246 = vmax.f32 %v1244, %v1245
    %v1247 = vrot.slane %v1246, 1
    %v1248 = vmax.f32 %v1246, %v1247
    %vm1249 = vcmp.eq.f32.partialorder %v1241, %v1248
    %v1250 = vsel %vm1249, %v1235, 8
    %v1251 = vsel %vm1231, %v1250, 2147483647
    %v1252 = vrot.slane %v1251, 4
    %vm1253 = vcmp.lt.s32.totalorder %v1251, %v1252
    %v1254 = vsel %vm1253, %v1251, %v1252
    %v1255 = vrot.slane %v1254, 2
    %vm1256 = vcmp.lt.s32.totalorder %v1254, %v1255
    %v1257 = vsel %vm1256, %v1254, %v1255
    %v1258 = vrot.slane %v1257, 1
    %vm1259 = vcmp.lt.s32.totalorder %v1257, %v1258
    %v1260 = vsel %vm1259, %v1257, %v1258
    %vm1261 = vcmask 57344
    %1262 = vst.msk [vmem:[#allocation4] sm:$0x1] %vm1261, %v1260
    %v1263 = vadd.f32 %v1248, %v1228
    %v1264 = vlaneseq
    %v1265 = vshrl.u32 %v1264, 7
    %v1266 = vsub.s32 0, %v1265
    %v1267 = vrot.slane %v1263, %v1266
    %v1268 = vmul.f32 %v1267, %v1238
    %v1269 = vsel %vm1231, %v1268, 0.0
    %1270 = vadd.xlane.f32.xlu0 %v1269
    %v1271 = vpop.xlane.xlu0 %1270
    %v1272 = vadd.f32 %v1271, %v1233
    %v1273 = vsel %vm1231, %v1272, -inf
    %v1274 = vrot.slane %v1273, 4
    %v1275 = vmax.f32 %v1273, %v1274
    %v1276 = vrot.slane %v1275, 2
    %v1277 = vmax.f32 %v1275, %v1276
    %v1278 = vrot.slane %v1277, 1
    %v1279 = vmax.f32 %v1277, %v1278
    %vm1280 = vcmp.eq.f32.partialorder %v1272, %v1279
    %v1281 = vsel %vm1280, %v1235, 8
    %v1282 = vsel %vm1231, %v1281, 2147483647
    %v1283 = vrot.slane %v1282, 4
    %vm1284 = vcmp.lt.s32.totalorder %v1282, %v1283
    %v1285 = vsel %vm1284, %v1282, %v1283
    %v1286 = vrot.slane %v1285, 2
    %vm1287 = vcmp.lt.s32.totalorder %v1285, %v1286
    %v1288 = vsel %vm1287, %v1285, %v1286
    %v1289 = vrot.slane %v1288, 1
    %vm1290 = vcmp.lt.s32.totalorder %v1288, %v1289
    %v1291 = vsel %vm1290, %v1288, %v1289
    %1292 = vst.msk [vmem:[#allocation4 + $0x1] sm:$0x1] %vm1261, %v1291
    %v1293 = vadd.f32 %v1279, %v1228
    %v1294 = vlaneseq
    %v1295 = vshrl.u32 %v1294, 7
    %v1296 = vsub.s32 1, %v1295
    %v1297 = vrot.slane %v1293, %v1296
    %v1298 = vmul.f32 %v1297, %v1238
    %v1299 = vsel %vm1231, %v1298, 0.0
    %1300 = vadd.xlane.f32.xlu0 %v1299
    %v1301 = vpop.xlane.xlu0 %1300
    %v1302 = vadd.f32 %v1301, %v1233
    %v1303 = vsel %vm1231, %v1302, -inf
    %v1304 = vrot.slane %v1303, 4
    %v1305 = vmax.f32 %v1303, %v1304
    %v1306 = vrot.slane %v1305, 2
    %v1307 = vmax.f32 %v1305, %v1306
    %v1308 = vrot.slane %v1307, 1
    %v1309 = vmax.f32 %v1307, %v1308
    %vm1310 = vcmp.eq.f32.partialorder %v1302, %v1309
    %v1311 = vsel %vm1310, %v1235, 8
    %v1312 = vsel %vm1231, %v1311, 2147483647
    %v1313 = vrot.slane %v1312, 4
    %vm1314 = vcmp.lt.s32.totalorder %v1312, %v1313
    %v1315 = vsel %vm1314, %v1312, %v1313
    %v1316 = vrot.slane %v1315, 2
    %vm1317 = vcmp.lt.s32.totalorder %v1315, %v1316
    %v1318 = vsel %vm1317, %v1315, %v1316
    %v1319 = vrot.slane %v1318, 1
    %vm1320 = vcmp.lt.s32.totalorder %v1318, %v1319
    %v1321 = vsel %vm1320, %v1318, %v1319
    %1322 = vst.msk [vmem:[#allocation4 + $0x2] sm:$0x1] %vm1261, %v1321
    %v1323 = vadd.f32 %v1309, %v1228
    %v1324 = vlaneseq
    %v1325 = vshrl.u32 %v1324, 7
    %v1326 = vsub.s32 2, %v1325
    %v1327 = vrot.slane %v1323, %v1326
    %v1328 = vmul.f32 %v1327, %v1238
    %v1329 = vsel %vm1231, %v1328, 0.0
    %1330 = vadd.xlane.f32.xlu0 %v1329
    %v1331 = vpop.xlane.xlu0 %1330
    %v1332 = vadd.f32 %v1331, %v1233
    %v1333 = vsel %vm1231, %v1332, -inf
    %v1334 = vrot.slane %v1333, 4
    %v1335 = vmax.f32 %v1333, %v1334
    %v1336 = vrot.slane %v1335, 2
    %v1337 = vmax.f32 %v1335, %v1336
    %v1338 = vrot.slane %v1337, 1
    %v1339 = vmax.f32 %v1337, %v1338
    %vm1340 = vcmp.eq.f32.partialorder %v1332, %v1339
    %v1341 = vsel %vm1340, %v1235, 8
    %v1342 = vsel %vm1231, %v1341, 2147483647
    %v1343 = vrot.slane %v1342, 4
    %vm1344 = vcmp.lt.s32.totalorder %v1342, %v1343
    %v1345 = vsel %vm1344, %v1342, %v1343
    %v1346 = vrot.slane %v1345, 2
    %vm1347 = vcmp.lt.s32.totalorder %v1345, %v1346
    %v1348 = vsel %vm1347, %v1345, %v1346
    %v1349 = vrot.slane %v1348, 1
    %vm1350 = vcmp.lt.s32.totalorder %v1348, %v1349
    %v1351 = vsel %vm1350, %v1348, %v1349
    %1352 = vst.msk [vmem:[#allocation4 + $0x3] sm:$0x1] %vm1261, %v1351
    %v1353 = vadd.f32 %v1339, %v1228
    %v1354 = vlaneseq
    %v1355 = vshrl.u32 %v1354, 7
    %v1356 = vsub.s32 3, %v1355
    %v1357 = vrot.slane %v1353, %v1356
    %v1358 = vmul.f32 %v1357, %v1238
    %v1359 = vsel %vm1231, %v1358, 0.0
    %1360 = vadd.xlane.f32.xlu0 %v1359
    %v1361 = vpop.xlane.xlu0 %1360
    %v1362 = vadd.f32 %v1361, %v1233
    %v1363 = vsel %vm1231, %v1362, -inf
    %v1364 = vrot.slane %v1363, 4
    %v1365 = vmax.f32 %v1363, %v1364
    %v1366 = vrot.slane %v1365, 2
    %v1367 = vmax.f32 %v1365, %v1366
    %v1368 = vrot.slane %v1367, 1
    %v1369 = vmax.f32 %v1367, %v1368
    %vm1370 = vcmp.eq.f32.partialorder %v1362, %v1369
    %v1371 = vsel %vm1370, %v1235, 8
    %v1372 = vsel %vm1231, %v1371, 2147483647
    %v1373 = vrot.slane %v1372, 4
    %vm1374 = vcmp.lt.s32.totalorder %v1372, %v1373
    %v1375 = vsel %vm1374, %v1372, %v1373
    %v1376 = vrot.slane %v1375, 2
    %vm1377 = vcmp.lt.s32.totalorder %v1375, %v1376
    %v1378 = vsel %vm1377, %v1375, %v1376
    %v1379 = vrot.slane %v1378, 1
    %vm1380 = vcmp.lt.s32.totalorder %v1378, %v1379
    %v1381 = vsel %vm1380, %v1378, %v1379
    %1382 = vst.msk [vmem:[#allocation4 + $0x4] sm:$0x1] %vm1261, %v1381
    %v1383 = vadd.f32 %v1369, %v1228
    %v1384 = vlaneseq
    %v1385 = vshrl.u32 %v1384, 7
    %v1386 = vsub.s32 4, %v1385
    %v1387 = vrot.slane %v1383, %v1386
    %v1388 = vmul.f32 %v1387, %v1238
    %v1389 = vsel %vm1231, %v1388, 0.0
    %1390 = vadd.xlane.f32.xlu0 %v1389
    %v1391 = vpop.xlane.xlu0 %1390
    %v1392 = vadd.f32 %v1391, %v1233
    %v1393 = vsel %vm1231, %v1392, -inf
    %v1394 = vrot.slane %v1393, 4
    %v1395 = vmax.f32 %v1393, %v1394
    %v1396 = vrot.slane %v1395, 2
    %v1397 = vmax.f32 %v1395, %v1396
    %v1398 = vrot.slane %v1397, 1
    %v1399 = vmax.f32 %v1397, %v1398
    %vm1400 = vcmp.eq.f32.partialorder %v1392, %v1399
    %v1401 = vsel %vm1400, %v1235, 8
    %v1402 = vsel %vm1231, %v1401, 2147483647
    %v1403 = vrot.slane %v1402, 4
    %vm1404 = vcmp.lt.s32.totalorder %v1402, %v1403
    %v1405 = vsel %vm1404, %v1402, %v1403
    %v1406 = vrot.slane %v1405, 2
    %vm1407 = vcmp.lt.s32.totalorder %v1405, %v1406
    %v1408 = vsel %vm1407, %v1405, %v1406
    %v1409 = vrot.slane %v1408, 1
    %vm1410 = vcmp.lt.s32.totalorder %v1408, %v1409
    %v1411 = vsel %vm1410, %v1408, %v1409
    %1412 = vst.msk [vmem:[#allocation4 + $0x5] sm:$0x1] %vm1261, %v1411
    %v1413 = vadd.f32 %v1399, %v1228
    %v1414 = vlaneseq
    %v1415 = vshrl.u32 %v1414, 7
    %v1416 = vsub.s32 5, %v1415
    %v1417 = vrot.slane %v1413, %v1416
    %v1418 = vmul.f32 %v1417, %v1238
    %v1419 = vsel %vm1231, %v1418, 0.0
    %1420 = vadd.xlane.f32.xlu0 %v1419
    %v1421 = vpop.xlane.xlu0 %1420
    %v1422 = vadd.f32 %v1421, %v1233
    %v1423 = vsel %vm1231, %v1422, -inf
    %v1424 = vrot.slane %v1423, 4
    %v1425 = vmax.f32 %v1423, %v1424
    %v1426 = vrot.slane %v1425, 2
    %v1427 = vmax.f32 %v1425, %v1426
    %v1428 = vrot.slane %v1427, 1
    %v1429 = vmax.f32 %v1427, %v1428
    %vm1430 = vcmp.eq.f32.partialorder %v1422, %v1429
    %v1431 = vsel %vm1430, %v1235, 8
    %v1432 = vsel %vm1231, %v1431, 2147483647
    %v1433 = vrot.slane %v1432, 4
    %vm1434 = vcmp.lt.s32.totalorder %v1432, %v1433
    %v1435 = vsel %vm1434, %v1432, %v1433
    %v1436 = vrot.slane %v1435, 2
    %vm1437 = vcmp.lt.s32.totalorder %v1435, %v1436
    %v1438 = vsel %vm1437, %v1435, %v1436
    %v1439 = vrot.slane %v1438, 1
    %vm1440 = vcmp.lt.s32.totalorder %v1438, %v1439
    %v1441 = vsel %vm1440, %v1438, %v1439
    %1442 = vst.msk [vmem:[#allocation4 + $0x6] sm:$0x1] %vm1261, %v1441
    %v1443 = vadd.f32 %v1429, %v1228
    %v1444 = vlaneseq
    %v1445 = vshrl.u32 %v1444, 7
    %v1446 = vsub.s32 6, %v1445
    %v1447 = vrot.slane %v1443, %v1446
    %v1448 = vmul.f32 %v1447, %v1238
    %v1449 = vsel %vm1231, %v1448, 0.0
    %1450 = vadd.xlane.f32.xlu0 %v1449
    %v1451 = vpop.xlane.xlu0 %1450
    %v1452 = vadd.f32 %v1451, %v1233
    %v1453 = vsel %vm1231, %v1452, -inf
    %v1454 = vrot.slane %v1453, 4
    %v1455 = vmax.f32 %v1453, %v1454
    %v1456 = vrot.slane %v1455, 2
    %v1457 = vmax.f32 %v1455, %v1456
    %v1458 = vrot.slane %v1457, 1
    %v1459 = vmax.f32 %v1457, %v1458
    %vm1460 = vcmp.eq.f32.partialorder %v1452, %v1459
    %v1461 = vsel %vm1460, %v1235, 8
    %v1462 = vsel %vm1231, %v1461, 2147483647
    %v1463 = vrot.slane %v1462, 4
    %vm1464 = vcmp.lt.s32.totalorder %v1462, %v1463
    %v1465 = vsel %vm1464, %v1462, %v1463
    %v1466 = vrot.slane %v1465, 2
    %vm1467 = vcmp.lt.s32.totalorder %v1465, %v1466
    %v1468 = vsel %vm1467, %v1465, %v1466
    %v1469 = vrot.slane %v1468, 1
    %vm1470 = vcmp.lt.s32.totalorder %v1468, %v1469
    %v1471 = vsel %vm1470, %v1468, %v1469
    %1472 = vst.msk [vmem:[#allocation4 + $0x7] sm:$0x1] %vm1261, %v1471
    %v1473 = vadd.f32 %v1459, %v1228
    %v1474 = vlaneseq
    %v1475 = vshrl.u32 %v1474, 7
    %v1476 = vsub.s32 7, %v1475
    %v1477 = vrot.slane %v1473, %v1476
    %v1478 = vmul.f32 %v1477, %v1238
    %v1479 = vsel %vm1231, %v1478, 0.0
    %1480 = vadd.xlane.f32.xlu0 %v1479
    %v1481 = vpop.xlane.xlu0 %1480
    %v1482 = vadd.f32 %v1481, %v1233
    %vm1483 = vcmask 39968
    %v1484 = vsel %vm1483, %v1482, -inf
    %v1485 = vrot.slane %v1484, 4
    %v1486 = vmax.f32 %v1484, %v1485
    %v1487 = vrot.slane %v1486, 2
    %v1488 = vmax.f32 %v1486, %v1487
    %v1489 = vrot.slane %v1488, 1
    %v1490 = vmax.f32 %v1488, %v1489
    %vm1491 = vcmp.eq.f32.partialorder %v1482, %v1490
    %v1492 = vsel %vm1491, %v1235, 8
    %v1493 = vsel %vm1483, %v1492, 2147483647
    %v1494 = vrot.slane %v1493, 4
    %vm1495 = vcmp.lt.s32.totalorder %v1493, %v1494
    %v1496 = vsel %vm1495, %v1493, %v1494
    %v1497 = vrot.slane %v1496, 2
    %vm1498 = vcmp.lt.s32.totalorder %v1496, %v1497
    %v1499 = vsel %vm1498, %v1496, %v1497
    %v1500 = vrot.slane %v1499, 1
    %vm1501 = vcmp.lt.s32.totalorder %v1499, %v1500
    %v1502 = vsel %vm1501, %v1499, %v1500
    %1504 = vset.pattern.permute.xlu0 4
    %1505 = vperm.xlu0 %1504, %v1490
    %v1506 = vpop.permute.xlu0 %1505
    %1508 = vst [vmem:[#allocation15] sm:$0x1] %v1506
    %1509 = vset.pattern.permute.xlu0 4
    %1510 = vperm.xlu0 %1509, %v1502
    %v1511 = vpop.permute.xlu0 %1510
    %1512 = vst [vmem:[#allocation13 + $0x7] sm:$0x1] %v1511
    %vm1513 = vcmp.eq.s32.totalorder %v252, %v1511
    %v1514 = vsel %vm1513, 1, 0
    %v1515 = vld [vmem:[#allocation4 + $0x7] sm:$0x1]
    %v1516 = vmul.u32 %v1515, %v1514
    %v1517 = vsel %vm1261, %v1516, 0
    %v1518 = vand.u32 %v1517, 65535
    %v1519 = vshrl.u32 %v1517, 16
    %v1520 = vcvt.s32.f32 %v1518
    %v1521 = vcvt.s32.f32 %v1519
    %1522 = vadd.xlane.f32.xlu0 %v1520
    %v1523 = vpop.xlane.xlu0 %1522
    %1524 = vadd.xlane.f32.xlu0 %v1521
    %v1525 = vpop.xlane.xlu0 %1524
    %v1526 = vcvt.f32.s32 %v1523
    %v1527 = vcvt.f32.s32 %v1525
    %v1528 = vshll.u32 %v1527, 16
    %v1529 = vadd.s32 %v1528, %v1526
    %1530 = vst [vmem:[#allocation13 + $0x6] sm:$0x1] %v1529
    %vm1531 = vcmp.eq.s32.totalorder %v252, %v1529
    %v1532 = vsel %vm1531, 1, 0
    %v1533 = vld [vmem:[#allocation4 + $0x6] sm:$0x1]
    %v1534 = vmul.u32 %v1533, %v1532
    %v1535 = vsel %vm1261, %v1534, 0
    %v1536 = vand.u32 %v1535, 65535
    %v1537 = vshrl.u32 %v1535, 16
    %v1538 = vcvt.s32.f32 %v1536
    %v1539 = vcvt.s32.f32 %v1537
    %1540 = vadd.xlane.f32.xlu0 %v1538
    %v1541 = vpop.xlane.xlu0 %1540
    %1542 = vadd.xlane.f32.xlu0 %v1539
    %v1543 = vpop.xlane.xlu0 %1542
    %v1544 = vcvt.f32.s32 %v1541
    %v1545 = vcvt.f32.s32 %v1543
    %v1546 = vshll.u32 %v1545, 16
    %v1547 = vadd.s32 %v1546, %v1544
    %1548 = vst [vmem:[#allocation13 + $0x5] sm:$0x1] %v1547
    %vm1549 = vcmp.eq.s32.totalorder %v252, %v1547
    %v1550 = vsel %vm1549, 1, 0
    %v1551 = vld [vmem:[#allocation4 + $0x5] sm:$0x1]
    %v1552 = vmul.u32 %v1551, %v1550
    %v1553 = vsel %vm1261, %v1552, 0
    %v1554 = vand.u32 %v1553, 65535
    %v1555 = vshrl.u32 %v1553, 16
    %v1556 = vcvt.s32.f32 %v1554
    %v1557 = vcvt.s32.f32 %v1555
    %1558 = vadd.xlane.f32.xlu0 %v1556
    %v1559 = vpop.xlane.xlu0 %1558
    %1560 = vadd.xlane.f32.xlu0 %v1557
    %v1561 = vpop.xlane.xlu0 %1560
    %v1562 = vcvt.f32.s32 %v1559
    %v1563 = vcvt.f32.s32 %v1561
    %v1564 = vshll.u32 %v1563, 16
    %v1565 = vadd.s32 %v1564, %v1562
    %1566 = vst [vmem:[#allocation13 + $0x4] sm:$0x1] %v1565
    %vm1567 = vcmp.eq.s32.totalorder %v252, %v1565
    %v1568 = vsel %vm1567, 1, 0
    %v1569 = vld [vmem:[#allocation4 + $0x4] sm:$0x1]
    %v1570 = vmul.u32 %v1569, %v1568
    %v1571 = vsel %vm1261, %v1570, 0
    %v1572 = vand.u32 %v1571, 65535
    %v1573 = vshrl.u32 %v1571, 16
    %v1574 = vcvt.s32.f32 %v1572
    %v1575 = vcvt.s32.f32 %v1573
    %1576 = vadd.xlane.f32.xlu0 %v1574
    %v1577 = vpop.xlane.xlu0 %1576
    %1578 = vadd.xlane.f32.xlu0 %v1575
    %v1579 = vpop.xlane.xlu0 %1578
    %v1580 = vcvt.f32.s32 %v1577
    %v1581 = vcvt.f32.s32 %v1579
    %v1582 = vshll.u32 %v1581, 16
    %v1583 = vadd.s32 %v1582, %v1580
    %1584 = vst [vmem:[#allocation13 + $0x3] sm:$0x1] %v1583
    %vm1585 = vcmp.eq.s32.totalorder %v252, %v1583
    %v1586 = vsel %vm1585, 1, 0
    %v1587 = vld [vmem:[#allocation4 + $0x3] sm:$0x1]
    %v1588 = vmul.u32 %v1587, %v1586
    %v1589 = vsel %vm1261, %v1588, 0
    %v1590 = vand.u32 %v1589, 65535
    %v1591 = vshrl.u32 %v1589, 16
    %v1592 = vcvt.s32.f32 %v1590
    %v1593 = vcvt.s32.f32 %v1591
    %1594 = vadd.xlane.f32.xlu0 %v1592
    %v1595 = vpop.xlane.xlu0 %1594
    %1596 = vadd.xlane.f32.xlu0 %v1593
    %v1597 = vpop.xlane.xlu0 %1596
    %v1598 = vcvt.f32.s32 %v1595
    %v1599 = vcvt.f32.s32 %v1597
    %v1600 = vshll.u32 %v1599, 16
    %v1601 = vadd.s32 %v1600, %v1598
    %1602 = vst [vmem:[#allocation13 + $0x2] sm:$0x1] %v1601
    %vm1603 = vcmp.eq.s32.totalorder %v252, %v1601
    %v1604 = vsel %vm1603, 1, 0
    %v1605 = vld [vmem:[#allocation4 + $0x2] sm:$0x1]
    %v1606 = vmul.u32 %v1605, %v1604
    %v1607 = vsel %vm1261, %v1606, 0
    %v1608 = vand.u32 %v1607, 65535
    %v1609 = vshrl.u32 %v1607, 16
    %v1610 = vcvt.s32.f32 %v1608
    %v1611 = vcvt.s32.f32 %v1609
    %1612 = vadd.xlane.f32.xlu0 %v1610
    %v1613 = vpop.xlane.xlu0 %1612
    %1614 = vadd.xlane.f32.xlu0 %v1611
    %v1615 = vpop.xlane.xlu0 %1614
    %v1616 = vcvt.f32.s32 %v1613
    %v1617 = vcvt.f32.s32 %v1615
    %v1618 = vshll.u32 %v1617, 16
    %v1619 = vadd.s32 %v1618, %v1616
    %1620 = vst [vmem:[#allocation13 + $0x1] sm:$0x1] %v1619
    %vm1621 = vcmp.eq.s32.totalorder %v252, %v1619
    %v1622 = vsel %vm1621, 1, 0
    %v1623 = vld [vmem:[#allocation4 + $0x1] sm:$0x1]
    %v1624 = vmul.u32 %v1623, %v1622
    %v1625 = vsel %vm1261, %v1624, 0
    %v1626 = vand.u32 %v1625, 65535
    %v1627 = vshrl.u32 %v1625, 16
    %v1628 = vcvt.s32.f32 %v1626
    %v1629 = vcvt.s32.f32 %v1627
    %1630 = vadd.xlane.f32.xlu0 %v1628
    %v1631 = vpop.xlane.xlu0 %1630
    %1632 = vadd.xlane.f32.xlu0 %v1629
    %v1633 = vpop.xlane.xlu0 %1632
    %v1634 = vcvt.f32.s32 %v1631
    %v1635 = vcvt.f32.s32 %v1633
    %v1636 = vshll.u32 %v1635, 16
    %v1637 = vadd.s32 %v1636, %v1634
    %1638 = vst [vmem:[#allocation13] sm:$0x1] %v1637
    %vm1639 = vcmp.eq.s32.totalorder %v252, %v1637
    %v1640 = vsel %vm1639, 1, 0
    %v1641 = vld [vmem:[#allocation4] sm:$0x1]
    %v1642 = vmul.u32 %v1641, %v1640
    %v1643 = vsel %vm1261, %v1642, 0
    %v1644 = vand.u32 %v1643, 65535
    %v1645 = vshrl.u32 %v1643, 16
    %v1646 = vcvt.s32.f32 %v1644
    %v1647 = vcvt.s32.f32 %v1645
    %1648 = vadd.xlane.f32.xlu0 %v1646
    %v1649 = vpop.xlane.xlu0 %1648
    %1650 = vadd.xlane.f32.xlu0 %v1647
    %v1651 = vpop.xlane.xlu0 %1650
    %v1652 = vcvt.f32.s32 %v1649
    %v1653 = vcvt.f32.s32 %v1651
    %v1654 = vshll.u32 %v1653, 16
    %v1655 = vadd.s32 %v1654, %v1652
    %1656 = vst [vmem:[#allocation16] sm:$0x1] %v1655
    // Predicated region
    $region54: #{tpu_custom_call.1} parent=1 // pred_check
      _
    $region55: #{tpu_custom_call.1} parent=1 // pred_check_branch
      %1658 = sbr.rel (0) target = $region57
    $region56: #{tpu_custom_call.1} parent=1 // pred_region
      %s1660 = ssub.s32 128, 128
      %1661 = vsyncadd [#allocation7], %s1660
      %s1663 = sshll.u32 [#allocation12], 4
      %s1664 = int_to_ptr.vmem [resolvable:$true] %s1663
      %1666 = dma.vmem_to_hbm [thread:$0]  %s1664, 128, %s10, [#allocation7]
    $region57: #{tpu_custom_call.1} parent=1 // pred_fallthru
      _
    // Predicated region
    $region58: #{tpu_custom_call.1} parent=1 // pred_check
      _
    $region59: #{tpu_custom_call.1} parent=1 // pred_check_branch
      %1668 = sbr.rel (0) target = $region61
    $region60: #{tpu_custom_call.1} parent=1 // pred_region
      %s1670 = ssub.s32 128, 128
      %1671 = vsyncadd [#allocation14], %s1670
      %s1673 = sshll.u32 [#allocation13], 4
      %s1674 = int_to_ptr.vmem [resolvable:$true] %s1673
      %1676 = dma.vmem_to_hbm [thread:$0]  %s1674, 128, %s11, [#allocation14]
    $region61: #{tpu_custom_call.1} parent=1 // pred_fallthru
      _
    // Predicated region
    $region62: #{tpu_custom_call.1} parent=1 // pred_check
      _
    $region63: #{tpu_custom_call.1} parent=1 // pred_check_branch
      %1678 = sbr.rel (0) target = $region65
    $region64: #{tpu_custom_call.1} parent=1 // pred_region
      %s1680 = ssub.s32 16, 16
      %1681 = vsyncadd [#allocation14], %s1680
      %s1683 = sshll.u32 [#allocation15], 4
      %s1684 = int_to_ptr.vmem [resolvable:$true] %s1683
      %1686 = dma.vmem_to_hbm [thread:$0]  %s1684, 16, %s12, [#allocation14]
    $region65: #{tpu_custom_call.1} parent=1 // pred_fallthru
      _
    // Predicated region
    $region66: #{tpu_custom_call.1} parent=1 // pred_check
      _
    $region67: #{tpu_custom_call.1} parent=1 // pred_check_branch
      %1688 = sbr.rel (0) target = $region69
    $region68: #{tpu_custom_call.1} parent=1 // pred_region
      %s1690 = ssub.s32 16, 16
      %1691 = vsyncadd [#allocation17], %s1690
      %s1693 = sshll.u32 [#allocation16], 4
      %s1694 = int_to_ptr.vmem [resolvable:$true] %s1693
      %1696 = dma.vmem_to_hbm [thread:$0]  %s1694, 16, %s13, [#allocation17]
    $region69: #{tpu_custom_call.1} parent=1 // pred_fallthru
      _
    // Predicated region
    $region70: #{tpu_custom_call.1} parent=1 // pred_check
      _
    $region71: #{tpu_custom_call.1} parent=1 // pred_check_branch
      %1698 = sbr.rel (0) target = $region73
    $region72: #{tpu_custom_call.1} parent=1 // pred_region
      %1699 = dma.done [#allocation7], 128
    $region73: #{tpu_custom_call.1} parent=1 // pred_fallthru
      _
    // Predicated region
    $region74: #{tpu_custom_call.1} parent=1 // pred_check
      _
    $region75: #{tpu_custom_call.1} parent=1 // pred_check_branch
      %1701 = sbr.rel (0) target = $region77
    $region76: #{tpu_custom_call.1} parent=1 // pred_region
      %1702 = dma.done [#allocation14], 128
    $region77: #{tpu_custom_call.1} parent=1 // pred_fallthru
      _
    // Predicated region
    $region78: #{tpu_custom_call.1} parent=1 // pred_check
      _
    $region79: #{tpu_custom_call.1} parent=1 // pred_check_branch
      %1704 = sbr.rel (0) target = $region81
    $region80: #{tpu_custom_call.1} parent=1 // pred_region
      %1705 = dma.done [#allocation14], 16
    $region81: #{tpu_custom_call.1} parent=1 // pred_fallthru
      _
    // Predicated region
    $region82: #{tpu_custom_call.1} parent=1 // pred_check
      _
    $region83: #{tpu_custom_call.1} parent=1 // pred_check_branch
      %1707 = sbr.rel (0) target = $region85
    $region84: #{tpu_custom_call.1} parent=1 // pred_region
      %1708 = dma.done [#allocation17], 16
    $region85: #{tpu_custom_call.1} parent=1 // pred_fallthru
      _
    %1709 = vsyncpa [#allocation6], 1
    %1710 = vsyncpa [#allocation11], 1
    %1711 = vsyncpa [#allocation7], 1
    %1712 = vsyncpa [#allocation14], 1
    %1713 = vsyncpa [#allocation17], 1
    %1714 = vsyncpa [#allocation8], 1

</llo_original>
